<compile_context>
chip_gen: v7x
topology: tpu7x:2x2x1
jax: 0.10.0
libtpu: 0.0.40
codegen_flags: <defaults>
</compile_context>

<pallas_src>
import functools

import jax
import jax.numpy as jnp
from jax import lax
from jax.experimental import pallas as pl
from jax.experimental.pallas import tpu as pltpu

CONTEXT_SIZE = 256          # global `context_size` in the reference script
LN_EPS = 1e-5               # PyTorch nn.LayerNorm default
NEG_INF = -1e30             # finite mask value (robust through approx reciprocal)


def _detect_vmem_limit():
    """3/4 of detected per-core VMEM, capped at 100 MiB; None -> compiler default."""
    try:
        info = pltpu.get_tpu_info()
        cap = getattr(info, "vmem_capacity_bytes", None)
        if not cap:
            return None
        return int(min(cap * 3 // 4, 100 * 1024 * 1024))
    except Exception:
        return None


_VMEM_LIMIT = _detect_vmem_limit()


def _compiler_params(dimension_semantics):
    if _VMEM_LIMIT is None:
        return pltpu.CompilerParams(dimension_semantics=dimension_semantics)
    return pltpu.CompilerParams(dimension_semantics=dimension_semantics,
                                vmem_limit_bytes=_VMEM_LIMIT)


def _layernorm(x, gamma, beta):
    """Biased-variance LayerNorm over the last axis (matches torch LN), f32 math."""
    mean = jnp.mean(x, axis=-1, keepdims=True)
    xc = x - mean
    var = jnp.mean(xc * xc, axis=-1, keepdims=True)
    return (xc * lax.rsqrt(var + LN_EPS)) * gamma + beta


def _pick_tile(dim, target, mult):
    """Largest tile <= target that divides dim and is a multiple of `mult`,
    falling back to the full dim (always a legal block)."""
    if dim <= target:
        return dim
    t = (target // mult) * mult
    while t >= mult:
        if dim % t == 0:
            return t
        t -= mult
    return dim


# ------------------------- fused transformer block -------------------------

def _block_kernel(x_ref, g1_ref, b1_ref, wqkv_ref, relb_ref, wp_ref, bp_ref,
                  g2_ref, b2_ref, w1_ref, fb1_ref, w2_ref, fb2_ref, o_ref,
                  *, n_heads, head_size):
    # x: (T, C) f32        g*/b*: (1, C) f32
    # wqkv: (C, 3C) bf16   relb: (n_heads, T, T) bf16 (scale/mask baked in)
    # wp: (C, C) bf16      w1: (C, 4C) bf16   w2: (4C, C) bf16
    x = x_ref[...]
    C = x.shape[1]

    # ---------------- attention ----------------
    h = _layernorm(x, g1_ref[...], b1_ref[...])
    hb = h.astype(jnp.bfloat16)
    # single fused QKV matmul (N = 3C), cast to bf16 once
    qkv = jnp.dot(hb, wqkv_ref[...],
                  preferred_element_type=jnp.float32).astype(jnp.bfloat16)

    heads_out = []
    for hd in range(n_heads):                       # static unroll (small n_heads)
        lo = hd * head_size
        hi = lo + head_size
        qh = qkv[:, lo:hi]                          # scale already baked into wq
        kh = qkv[:, C + lo:C + hi]
        vh = qkv[:, 2 * C + lo:2 * C + hi]
        # contract feature axes directly — no explicit transpose
        s = lax.dot_general(qh, kh, (((1,), (1,)), ((), ())),
                            preferred_element_type=jnp.float32)
        s = s + relb_ref[hd]                        # bias + causal mask (finite -1e30)
        m = jnp.max(s, axis=-1, keepdims=True)
        p = jnp.exp(s - m)
        inv = pl.reciprocal(jnp.sum(p, axis=-1, keepdims=True), approx=True)
        attn = (p * inv).astype(jnp.bfloat16)       # attn dropout = identity
        heads_out.append(jnp.dot(attn, vh, preferred_element_type=jnp.float32))

    # single K=C output projection instead of per-head K=head_size folds
    o_heads = jnp.concatenate(heads_out, axis=-1).astype(jnp.bfloat16)   # (T, C)
    sa = jnp.dot(o_heads, wp_ref[...], preferred_element_type=jnp.float32)
    x = x + sa + bp_ref[...]                        # residual + proj bias (f32)

    # ---------------- feed-forward ----------------
    h2 = _layernorm(x, g2_ref[...], b2_ref[...])
    h1 = jnp.dot(h2.astype(jnp.bfloat16), w1_ref[...],
                 preferred_element_type=jnp.float32) + fb1_ref[...]
    h1 = jnp.maximum(h1, 0.0)                       # ReLU in f32
    ff = jnp.dot(h1.astype(jnp.bfloat16), w2_ref[...],
                 preferred_element_type=jnp.float32) + fb2_ref[...]
    o_ref[...] = x + ff                             # residual (dropout = identity)


def block_forward(p, x, rel_idx, tril):
    """x: (B,T,C) -> (B,T,C); full pre-LN rel-pos MHA + FFN block, one kernel."""
    B, T, C = x.shape
    n_heads = len(p["heads"])
    head_size = C // n_heads
    scale = head_size ** -0.5

    # Stack per-head projections into one lane-dense (C, 3C) weight; bake the
    # softmax scale into the Q weights (parameter-side, zero kernel cost).
    wq = jnp.concatenate([hp["wq"] for hp in p["heads"]], axis=1) * scale
    wk = jnp.concatenate([hp["wk"] for hp in p["heads"]], axis=1)
    wv = jnp.concatenate([hp["wv"] for hp in p["heads"]], axis=1)
    wqkv = jnp.concatenate([wq, wk, wv], axis=1).astype(jnp.bfloat16)      # (C, 3C)

    # mean over head_size FIRST (parameter-only), then gather the (T,T) bias;
    # bake the causal mask in as a finite large-negative.
    relb = jnp.stack(
        [jnp.mean(hp["rel_emb"], axis=-1)[rel_idx] for hp in p["heads"]], axis=0)
    relb = jnp.where(tril[None, :, :], relb, NEG_INF).astype(jnp.bfloat16)

    kern = functools.partial(_block_kernel, n_heads=n_heads, head_size=head_size)
    return pl.pallas_call(
        kern,
        grid=(B,),
        out_shape=jax.ShapeDtypeStruct((B, T, C), jnp.float32),
        in_specs=[
            pl.BlockSpec((None, T, C), lambda b: (b, 0, 0)),      # x
            pl.BlockSpec((1, C), lambda b: (0, 0)),               # ln1 gamma
            pl.BlockSpec((1, C), lambda b: (0, 0)),               # ln1 beta
            pl.BlockSpec((C, 3 * C), lambda b: (0, 0)),           # fused QKV weight
            pl.BlockSpec((n_heads, T, T), lambda b: (0, 0, 0)),   # relb (+mask)
            pl.BlockSpec((C, C), lambda b: (0, 0)),               # proj weight
            pl.BlockSpec((1, C), lambda b: (0, 0)),               # proj bias
            pl.BlockSpec((1, C), lambda b: (0, 0)),               # ln2 gamma
            pl.BlockSpec((1, C), lambda b: (0, 0)),               # ln2 beta
            pl.BlockSpec((C, 4 * C), lambda b: (0, 0)),           # ffn w1
            pl.BlockSpec((1, 4 * C), lambda b: (0, 0)),           # ffn b1
            pl.BlockSpec((4 * C, C), lambda b: (0, 0)),           # ffn w2
            pl.BlockSpec((1, C), lambda b: (0, 0)),               # ffn b2
        ],
        out_specs=pl.BlockSpec((None, T, C), lambda b: (b, 0, 0)),
        compiler_params=_compiler_params(("parallel",)),
    )(x,
      p["ln1_g"].reshape(1, C), p["ln1_b"].reshape(1, C),
      wqkv, relb,
      p["proj_w"].astype(jnp.bfloat16), p["proj_b"].reshape(1, C),
      p["ln2_g"].reshape(1, C), p["ln2_b"].reshape(1, C),
      p["ff_w1"].astype(jnp.bfloat16), p["ff_b1"].reshape(1, 4 * C),
      p["ff_w2"].astype(jnp.bfloat16), p["ff_b2"].reshape(1, C))


# ------------------------------ tiled logits head ------------------------------

def _logits_kernel(x_ref, w_ref, b_ref, o_ref):
    o_ref[...] = jnp.dot(x_ref[...], w_ref[...],
                         preferred_element_type=jnp.float32) + b_ref[...]


def logits_linear(x2d, w, b):
    """x2d: (M, C) @ w: (C, V) + b -> (M, V).
    Vocab is the OUTER grid axis so the (C, V) weight is streamed once; only the
    (much smaller) bf16 activations are re-streamed."""
    M, C = x2d.shape
    V = w.shape[1]
    tm = _pick_tile(M, 512, 8)
    tn = _pick_tile(V, 512, 128)
    return pl.pallas_call(
        _logits_kernel,
        grid=(V // tn, M // tm),
        out_shape=jax.ShapeDtypeStruct((M, V), jnp.float32),
        in_specs=[
            pl.BlockSpec((tm, C), lambda j, i: (i, 0)),
            pl.BlockSpec((C, tn), lambda j, i: (0, j)),
            pl.BlockSpec((1, tn), lambda j, i: (0, j)),
        ],
        out_specs=pl.BlockSpec((tm, tn), lambda j, i: (i, j)),
        compiler_params=_compiler_params(("parallel", "parallel")),
    )(x2d.astype(jnp.bfloat16), w.astype(jnp.bfloat16), b.reshape(1, V))


# ------------------------------ model (glue) -------------------------------

def init_params(key, vocab_size, embed_dim, n_heads, n_blocks):
    head_size = embed_dim // n_heads

    def nrm(k, shape, scale=0.02):
        return scale * jax.random.normal(k, shape, dtype=jnp.float32)

    keys = iter(jax.random.split(key, 8 + n_blocks * (8 + 4 * n_heads)))
    params = {
        "tok_emb": nrm(next(keys), (vocab_size, embed_dim)),
        "pos_emb": nrm(next(keys), (CONTEXT_SIZE, embed_dim)),
        "lin_w": nrm(next(keys), (embed_dim, vocab_size)),
        "lin_b": jnp.zeros((vocab_size,), jnp.float32),
        "blocks": [],
    }
    for _ in range(n_blocks):
        blk = {
            "ln1_g": jnp.ones((embed_dim,), jnp.float32),
            "ln1_b": jnp.zeros((embed_dim,), jnp.float32),
            "ln2_g": jnp.ones((embed_dim,), jnp.float32),
            "ln2_b": jnp.zeros((embed_dim,), jnp.float32),
            "proj_w": nrm(next(keys), (embed_dim, embed_dim)),
            "proj_b": jnp.zeros((embed_dim,), jnp.float32),
            "ff_w1": nrm(next(keys), (embed_dim, 4 * embed_dim)),
            "ff_b1": jnp.zeros((4 * embed_dim,), jnp.float32),
            "ff_w2": nrm(next(keys), (4 * embed_dim, embed_dim)),
            "ff_b2": jnp.zeros((embed_dim,), jnp.float32),
            "heads": [],
        }
        for _ in range(n_heads):
            blk["heads"].append({
                "wq": nrm(next(keys), (embed_dim, head_size)),
                "wk": nrm(next(keys), (embed_dim, head_size)),
                "wv": nrm(next(keys), (embed_dim, head_size)),
                "rel_emb": nrm(next(keys), (2 * CONTEXT_SIZE - 1, head_size)),
            })
        params["blocks"].append(blk)
    return params


def transformer_forward(params, tokens):
    B, T = tokens.shape
    x = params["tok_emb"][tokens] + params["pos_emb"][:T][None, :, :]
    pos = jnp.arange(T)
    rel_idx = pos[None, :] - pos[:, None] + (CONTEXT_SIZE - 1)      # (T, T)
    tril = jnp.tril(jnp.ones((T, T), dtype=bool))
    for blk in params["blocks"]:
        x = block_forward(blk, x, rel_idx, tril)
    # reference forward never applies self.lnorm before the head -> skip it
    C = x.shape[-1]
    logits = logits_linear(x.reshape(B * T, C), params["lin_w"], params["lin_b"])
    return logits.reshape(B, T, -1)


# ------------------------- pure-JAX reference (f32) -------------------------

def reference_forward(params, tokens):
    B, T = tokens.shape
    x = params["tok_emb"][tokens] + params["pos_emb"][:T][None, :, :]
    pos = jnp.arange(T)
    rel = pos[None, :] - pos[:, None] + (CONTEXT_SIZE - 1)
    mask = jnp.tril(jnp.ones((T, T), bool))
    for p in params["blocks"]:
        h = _layernorm(x, p["ln1_g"], p["ln1_b"])
        outs = []
        for hp in p["heads"]:
            H = hp["wq"].shape[1]
            q, k, v = h @ hp["wq"], h @ hp["wk"], h @ hp["wv"]
            s = jnp.einsum("btd,bsd->bts", q, k) * (H ** -0.5)
            s = s + jnp.mean(hp["rel_emb"][rel], axis=-1)    # torch order: gather->mean
            s = jnp.where(mask, s, -jnp.inf)
            a = jax.nn.softmax(s, axis=-1)
            outs.append(jnp.einsum("bts,bsd->btd", a, v))
        sa = jnp.concatenate(outs, axis=-1) @ p["proj_w"] + p["proj_b"]
        x = x + sa
        h2 = _layernorm(x, p["ln2_g"], p["ln2_b"])
        ff = jnp.maximum(h2 @ p["ff_w1"] + p["ff_b1"], 0.0) @ p["ff_w2"] + p["ff_b2"]
        x = x + ff
    return x @ params["lin_w"] + params["lin_b"]


# ----------------------------------- main -----------------------------------

if __name__ == "__main__":
    # Small, module-consistent config (embed_dim kept a multiple of 128 so all
    # attention/FFN/logits stores are lane-dense, per review).
    vocab_size, embed_dim, n_heads, n_blocks = 512, 128, 2, 2
    B, T = 2, 16

    key = jax.random.PRNGKey(0)
    key, kp, kt = jax.random.split(key, 3)
    params = init_params(kp, vocab_size, embed_dim, n_heads, n_blocks)
    tokens = jax.random.randint(kt, (B, T), 0, vocab_size, dtype=jnp.int32)

    fwd = jax.jit(transformer_forward)
    logits = fwd(params, tokens)
    jax.block_until_ready(logits)
    assert logits.shape == (B, T, vocab_size)
    assert bool(jnp.all(jnp.isfinite(logits)))

    ref = reference_forward(params, tokens)
    max_err = float(jnp.max(jnp.abs(logits - ref)))
    assert max_err < 2e-2, f"mismatch vs reference: {max_err}"
    print("KERNEL_OK")
</pallas_src>

<mosaic_0001>
module attributes {stable_mosaic.version = 11 : i64} {
  func.func @_block_kernel(%arg0: i32, %arg1: memref<1x16x128xf32, #tpu.memory_space<vmem>>, %arg2: memref<1x128xf32, #tpu.memory_space<vmem>>, %arg3: memref<1x128xf32, #tpu.memory_space<vmem>>, %arg4: memref<128x384xbf16, #tpu.memory_space<vmem>>, %arg5: memref<2x16x16xbf16, #tpu.memory_space<vmem>>, %arg6: memref<128x128xbf16, #tpu.memory_space<vmem>>, %arg7: memref<1x128xf32, #tpu.memory_space<vmem>>, %arg8: memref<1x128xf32, #tpu.memory_space<vmem>>, %arg9: memref<1x128xf32, #tpu.memory_space<vmem>>, %arg10: memref<128x512xbf16, #tpu.memory_space<vmem>>, %arg11: memref<1x512xf32, #tpu.memory_space<vmem>>, %arg12: memref<512x128xbf16, #tpu.memory_space<vmem>>, %arg13: memref<1x128xf32, #tpu.memory_space<vmem>>, %arg14: memref<1x16x128xf32, #tpu.memory_space<vmem>>) attributes {dimension_semantics = [#tpu.dimension_semantics<parallel>], iteration_bounds = array<i64: 2>, scalar_prefetch = 0 : i64, scratch_operands = 0 : i64, tpu.core_type = #tpu.core_type<tc>, window_params = [{transform_indices = @transform_0, window_bounds = array<i64: 1, 16, 128>}, {pipeline_mode = #tpu.pipeline_mode<synchronous>, transform_indices = @transform_1, window_bounds = array<i64: 1, 128>}, {pipeline_mode = #tpu.pipeline_mode<synchronous>, transform_indices = @transform_2, window_bounds = array<i64: 1, 128>}, {pipeline_mode = #tpu.pipeline_mode<synchronous>, transform_indices = @transform_3, window_bounds = array<i64: 128, 384>}, {pipeline_mode = #tpu.pipeline_mode<synchronous>, transform_indices = @transform_4, window_bounds = array<i64: 2, 16, 16>}, {pipeline_mode = #tpu.pipeline_mode<synchronous>, transform_indices = @transform_5, window_bounds = array<i64: 128, 128>}, {pipeline_mode = #tpu.pipeline_mode<synchronous>, transform_indices = @transform_6, window_bounds = array<i64: 1, 128>}, {pipeline_mode = #tpu.pipeline_mode<synchronous>, transform_indices = @transform_7, window_bounds = array<i64: 1, 128>}, {pipeline_mode = #tpu.pipeline_mode<synchronous>, transform_indices = @transform_8, window_bounds = array<i64: 1, 128>}, {pipeline_mode = #tpu.pipeline_mode<synchronous>, transform_indices = @transform_9, window_bounds = array<i64: 128, 512>}, {pipeline_mode = #tpu.pipeline_mode<synchronous>, transform_indices = @transform_10, window_bounds = array<i64: 1, 512>}, {pipeline_mode = #tpu.pipeline_mode<synchronous>, transform_indices = @transform_11, window_bounds = array<i64: 512, 128>}, {pipeline_mode = #tpu.pipeline_mode<synchronous>, transform_indices = @transform_12, window_bounds = array<i64: 1, 128>}, {transform_indices = @transform_13, window_bounds = array<i64: 1, 16, 128>}]} {
    %c0 = arith.constant 0 : index
    %c0_0 = arith.constant 0 : index
    %c0_1 = arith.constant 0 : index
    %0 = vector.load %arg1[%c0, %c0_0, %c0_1] : memref<1x16x128xf32, #tpu.memory_space<vmem>>, vector<1x16x128xf32>
    %1 = vector.shape_cast %0 : vector<1x16x128xf32> to vector<16x128xf32>
    %c0_2 = arith.constant 0 : index
    %c0_3 = arith.constant 0 : index
    %2 = vector.load %arg2[%c0_2, %c0_3] : memref<1x128xf32, #tpu.memory_space<vmem>>, vector<1x128xf32>
    %c0_4 = arith.constant 0 : index
    %c0_5 = arith.constant 0 : index
    %3 = vector.load %arg3[%c0_4, %c0_5] : memref<1x128xf32, #tpu.memory_space<vmem>>, vector<1x128xf32>
    %cst = arith.constant dense<0.000000e+00> : vector<16xf32>
    %4 = vector.multi_reduction <add>, %1, %cst [1] : vector<16x128xf32> to vector<16xf32>
    %5 = vector.shape_cast %4 : vector<16xf32> to vector<16x1xf32>
    %cst_6 = arith.constant 1.280000e+02 : f32
    %6 = vector.broadcast %cst_6 : f32 to vector<16x1xf32>
    %7 = arith.divf %5, %6 : vector<16x1xf32>
    %8 = vector.broadcast %7 : vector<16x1xf32> to vector<16x128xf32>
    %9 = arith.subf %1, %8 : vector<16x128xf32>
    %10 = arith.mulf %9, %9 : vector<16x128xf32>
    %cst_7 = arith.constant dense<0.000000e+00> : vector<16xf32>
    %11 = vector.multi_reduction <add>, %10, %cst_7 [1] : vector<16x128xf32> to vector<16xf32>
    %12 = vector.shape_cast %11 : vector<16xf32> to vector<16x1xf32>
    %cst_8 = arith.constant 1.280000e+02 : f32
    %13 = vector.broadcast %cst_8 : f32 to vector<16x1xf32>
    %14 = arith.divf %12, %13 : vector<16x1xf32>
    %cst_9 = arith.constant 9.99999974E-6 : f32
    %15 = vector.broadcast %cst_9 : f32 to vector<16x1xf32>
    %16 = arith.addf %14, %15 : vector<16x1xf32>
    %17 = math.rsqrt %16 : vector<16x1xf32>
    %18 = vector.broadcast %17 : vector<16x1xf32> to vector<16x128xf32>
    %19 = arith.mulf %9, %18 : vector<16x128xf32>
    %20 = vector.broadcast %2 : vector<1x128xf32> to vector<16x128xf32>
    %21 = arith.mulf %19, %20 : vector<16x128xf32>
    %22 = vector.broadcast %3 : vector<1x128xf32> to vector<16x128xf32>
    %23 = arith.addf %21, %22 : vector<16x128xf32>
    %24 = arith.truncf %23 : vector<16x128xf32> to vector<16x128xbf16>
    %c0_10 = arith.constant 0 : index
    %c0_11 = arith.constant 0 : index
    %25 = vector.load %arg4[%c0_10, %c0_11] : memref<128x384xbf16, #tpu.memory_space<vmem>>, vector<128x384xbf16>
    %cst_12 = arith.constant dense<0.000000e+00> : vector<16x384xf32>
    %26 = tpu.matmul %24, %25, %cst_12 {dimension_numbers = #tpu.dot_dimension_numbers<[1], [0], [0], [1], [0, 0, 1, 1], [], []>} : vector<16x128xbf16>, vector<128x384xbf16>, vector<16x384xf32> -> vector<16x384xf32>
    %27 = arith.truncf %26 : vector<16x384xf32> to vector<16x384xbf16>
    %28 = vector.extract_strided_slice %27 {offsets = [0, 0], sizes = [16, 64], strides = [1, 1]} : vector<16x384xbf16> to vector<16x64xbf16>
    %29 = vector.extract_strided_slice %27 {offsets = [0, 128], sizes = [16, 64], strides = [1, 1]} : vector<16x384xbf16> to vector<16x64xbf16>
    %30 = vector.extract_strided_slice %27 {offsets = [0, 256], sizes = [16, 64], strides = [1, 1]} : vector<16x384xbf16> to vector<16x64xbf16>
    %cst_13 = arith.constant dense<0.000000e+00> : vector<16x16xf32>
    %31 = tpu.matmul %28, %29, %cst_13 {dimension_numbers = #tpu.dot_dimension_numbers<[1], [1], [0], [0], [0, 0, 1, 0], [], []>} : vector<16x64xbf16>, vector<16x64xbf16>, vector<16x16xf32> -> vector<16x16xf32>
    %c0_14 = arith.constant 0 : index
    %c0_15 = arith.constant 0 : index
    %c0_16 = arith.constant 0 : index
    %32 = vector.load %arg5[%c0_14, %c0_15, %c0_16] : memref<2x16x16xbf16, #tpu.memory_space<vmem>>, vector<1x16x16xbf16>
    %33 = vector.shape_cast %32 : vector<1x16x16xbf16> to vector<16x16xbf16>
    %34 = arith.extf %33 : vector<16x16xbf16> to vector<16x16xf32>
    %35 = arith.addf %31, %34 : vector<16x16xf32>
    %cst_17 = arith.constant dense<0xFF800000> : vector<16xf32>
    %36 = vector.multi_reduction <maximumf>, %35, %cst_17 [1] : vector<16x16xf32> to vector<16xf32>
    %37 = vector.shape_cast %36 : vector<16xf32> to vector<16x1xf32>
    %38 = vector.broadcast %37 : vector<16x1xf32> to vector<16x16xf32>
    %39 = arith.subf %35, %38 : vector<16x16xf32>
    %40 = math.exp %39 : vector<16x16xf32>
    %cst_18 = arith.constant dense<0.000000e+00> : vector<16xf32>
    %41 = vector.multi_reduction <add>, %40, %cst_18 [1] : vector<16x16xf32> to vector<16xf32>
    %42 = vector.shape_cast %41 : vector<16xf32> to vector<16x1xf32>
    %43 = tpu.reciprocal %42 {approx = true} : vector<16x1xf32> -> vector<16x1xf32>
    %44 = vector.broadcast %43 : vector<16x1xf32> to vector<16x16xf32>
    %45 = arith.mulf %40, %44 : vector<16x16xf32>
    %46 = arith.truncf %45 : vector<16x16xf32> to vector<16x16xbf16>
    %cst_19 = arith.constant dense<0.000000e+00> : vector<16x64xf32>
    %47 = tpu.matmul %46, %30, %cst_19 {dimension_numbers = #tpu.dot_dimension_numbers<[1], [0], [0], [1], [0, 0, 1, 1], [], []>} : vector<16x16xbf16>, vector<16x64xbf16>, vector<16x64xf32> -> vector<16x64xf32>
    %48 = vector.extract_strided_slice %27 {offsets = [0, 64], sizes = [16, 64], strides = [1, 1]} : vector<16x384xbf16> to vector<16x64xbf16>
    %49 = vector.extract_strided_slice %27 {offsets = [0, 192], sizes = [16, 64], strides = [1, 1]} : vector<16x384xbf16> to vector<16x64xbf16>
    %50 = vector.extract_strided_slice %27 {offsets = [0, 320], sizes = [16, 64], strides = [1, 1]} : vector<16x384xbf16> to vector<16x64xbf16>
    %cst_20 = arith.constant dense<0.000000e+00> : vector<16x16xf32>
    %51 = tpu.matmul %48, %49, %cst_20 {dimension_numbers = #tpu.dot_dimension_numbers<[1], [1], [0], [0], [0, 0, 1, 0], [], []>} : vector<16x64xbf16>, vector<16x64xbf16>, vector<16x16xf32> -> vector<16x16xf32>
    %c1 = arith.constant 1 : index
    %c0_21 = arith.constant 0 : index
    %c0_22 = arith.constant 0 : index
    %52 = vector.load %arg5[%c1, %c0_21, %c0_22] : memref<2x16x16xbf16, #tpu.memory_space<vmem>>, vector<1x16x16xbf16>
    %53 = vector.shape_cast %52 : vector<1x16x16xbf16> to vector<16x16xbf16>
    %54 = arith.extf %53 : vector<16x16xbf16> to vector<16x16xf32>
    %55 = arith.addf %51, %54 : vector<16x16xf32>
    %cst_23 = arith.constant dense<0xFF800000> : vector<16xf32>
    %56 = vector.multi_reduction <maximumf>, %55, %cst_23 [1] : vector<16x16xf32> to vector<16xf32>
    %57 = vector.shape_cast %56 : vector<16xf32> to vector<16x1xf32>
    %58 = vector.broadcast %57 : vector<16x1xf32> to vector<16x16xf32>
    %59 = arith.subf %55, %58 : vector<16x16xf32>
    %60 = math.exp %59 : vector<16x16xf32>
    %cst_24 = arith.constant dense<0.000000e+00> : vector<16xf32>
    %61 = vector.multi_reduction <add>, %60, %cst_24 [1] : vector<16x16xf32> to vector<16xf32>
    %62 = vector.shape_cast %61 : vector<16xf32> to vector<16x1xf32>
    %63 = tpu.reciprocal %62 {approx = true} : vector<16x1xf32> -> vector<16x1xf32>
    %64 = vector.broadcast %63 : vector<16x1xf32> to vector<16x16xf32>
    %65 = arith.mulf %60, %64 : vector<16x16xf32>
    %66 = arith.truncf %65 : vector<16x16xf32> to vector<16x16xbf16>
    %cst_25 = arith.constant dense<0.000000e+00> : vector<16x64xf32>
    %67 = tpu.matmul %66, %50, %cst_25 {dimension_numbers = #tpu.dot_dimension_numbers<[1], [0], [0], [1], [0, 0, 1, 1], [], []>} : vector<16x16xbf16>, vector<16x64xbf16>, vector<16x64xf32> -> vector<16x64xf32>
    %68 = tpu.concatenate %47, %67 in 1 : vector<16x64xf32>, vector<16x64xf32> -> vector<16x128xf32>
    %69 = arith.truncf %68 : vector<16x128xf32> to vector<16x128xbf16>
    %c0_26 = arith.constant 0 : index
    %c0_27 = arith.constant 0 : index
    %70 = vector.load %arg6[%c0_26, %c0_27] : memref<128x128xbf16, #tpu.memory_space<vmem>>, vector<128x128xbf16>
    %cst_28 = arith.constant dense<0.000000e+00> : vector<16x128xf32>
    %71 = tpu.matmul %69, %70, %cst_28 {dimension_numbers = #tpu.dot_dimension_numbers<[1], [0], [0], [1], [0, 0, 1, 1], [], []>} : vector<16x128xbf16>, vector<128x128xbf16>, vector<16x128xf32> -> vector<16x128xf32>
    %72 = arith.addf %1, %71 : vector<16x128xf32>
    %c0_29 = arith.constant 0 : index
    %c0_30 = arith.constant 0 : index
    %73 = vector.load %arg7[%c0_29, %c0_30] : memref<1x128xf32, #tpu.memory_space<vmem>>, vector<1x128xf32>
    %74 = vector.broadcast %73 : vector<1x128xf32> to vector<16x128xf32>
    %75 = arith.addf %72, %74 : vector<16x128xf32>
    %c0_31 = arith.constant 0 : index
    %c0_32 = arith.constant 0 : index
    %76 = vector.load %arg8[%c0_31, %c0_32] : memref<1x128xf32, #tpu.memory_space<vmem>>, vector<1x128xf32>
    %c0_33 = arith.constant 0 : index
    %c0_34 = arith.constant 0 : index
    %77 = vector.load %arg9[%c0_33, %c0_34] : memref<1x128xf32, #tpu.memory_space<vmem>>, vector<1x128xf32>
    %cst_35 = arith.constant dense<0.000000e+00> : vector<16xf32>
    %78 = vector.multi_reduction <add>, %75, %cst_35 [1] : vector<16x128xf32> to vector<16xf32>
    %79 = vector.shape_cast %78 : vector<16xf32> to vector<16x1xf32>
    %cst_36 = arith.constant 1.280000e+02 : f32
    %80 = vector.broadcast %cst_36 : f32 to vector<16x1xf32>
    %81 = arith.divf %79, %80 : vector<16x1xf32>
    %82 = vector.broadcast %81 : vector<16x1xf32> to vector<16x128xf32>
    %83 = arith.subf %75, %82 : vector<16x128xf32>
    %84 = arith.mulf %83, %83 : vector<16x128xf32>
    %cst_37 = arith.constant dense<0.000000e+00> : vector<16xf32>
    %85 = vector.multi_reduction <add>, %84, %cst_37 [1] : vector<16x128xf32> to vector<16xf32>
    %86 = vector.shape_cast %85 : vector<16xf32> to vector<16x1xf32>
    %cst_38 = arith.constant 1.280000e+02 : f32
    %87 = vector.broadcast %cst_38 : f32 to vector<16x1xf32>
    %88 = arith.divf %86, %87 : vector<16x1xf32>
    %cst_39 = arith.constant 9.99999974E-6 : f32
    %89 = vector.broadcast %cst_39 : f32 to vector<16x1xf32>
    %90 = arith.addf %88, %89 : vector<16x1xf32>
    %91 = math.rsqrt %90 : vector<16x1xf32>
    %92 = vector.broadcast %91 : vector<16x1xf32> to vector<16x128xf32>
    %93 = arith.mulf %83, %92 : vector<16x128xf32>
    %94 = vector.broadcast %76 : vector<1x128xf32> to vector<16x128xf32>
    %95 = arith.mulf %93, %94 : vector<16x128xf32>
    %96 = vector.broadcast %77 : vector<1x128xf32> to vector<16x128xf32>
    %97 = arith.addf %95, %96 : vector<16x128xf32>
    %98 = arith.truncf %97 : vector<16x128xf32> to vector<16x128xbf16>
    %c0_40 = arith.constant 0 : index
    %c0_41 = arith.constant 0 : index
    %99 = vector.load %arg10[%c0_40, %c0_41] : memref<128x512xbf16, #tpu.memory_space<vmem>>, vector<128x512xbf16>
    %cst_42 = arith.constant dense<0.000000e+00> : vector<16x512xf32>
    %100 = tpu.matmul %98, %99, %cst_42 {dimension_numbers = #tpu.dot_dimension_numbers<[1], [0], [0], [1], [0, 0, 1, 1], [], []>} : vector<16x128xbf16>, vector<128x512xbf16>, vector<16x512xf32> -> vector<16x512xf32>
    %c0_43 = arith.constant 0 : index
    %c0_44 = arith.constant 0 : index
    %101 = vector.load %arg11[%c0_43, %c0_44] : memref<1x512xf32, #tpu.memory_space<vmem>>, vector<1x512xf32>
    %102 = vector.broadcast %101 : vector<1x512xf32> to vector<16x512xf32>
    %103 = arith.addf %100, %102 : vector<16x512xf32>
    %cst_45 = arith.constant 0.000000e+00 : f32
    %104 = vector.broadcast %cst_45 : f32 to vector<16x512xf32>
    %105 = arith.maximumf %103, %104 : vector<16x512xf32>
    %106 = arith.truncf %105 : vector<16x512xf32> to vector<16x512xbf16>
    %c0_46 = arith.constant 0 : index
    %c0_47 = arith.constant 0 : index
    %107 = vector.load %arg12[%c0_46, %c0_47] : memref<512x128xbf16, #tpu.memory_space<vmem>>, vector<512x128xbf16>
    %cst_48 = arith.constant dense<0.000000e+00> : vector<16x128xf32>
    %108 = tpu.matmul %106, %107, %cst_48 {dimension_numbers = #tpu.dot_dimension_numbers<[1], [0], [0], [1], [0, 0, 1, 1], [], []>} : vector<16x512xbf16>, vector<512x128xbf16>, vector<16x128xf32> -> vector<16x128xf32>
    %c0_49 = arith.constant 0 : index
    %c0_50 = arith.constant 0 : index
    %109 = vector.load %arg13[%c0_49, %c0_50] : memref<1x128xf32, #tpu.memory_space<vmem>>, vector<1x128xf32>
    %110 = vector.broadcast %109 : vector<1x128xf32> to vector<16x128xf32>
    %111 = arith.addf %108, %110 : vector<16x128xf32>
    %112 = arith.addf %75, %111 : vector<16x128xf32>
    %c0_51 = arith.constant 0 : index
    %c0_52 = arith.constant 0 : index
    %c0_53 = arith.constant 0 : index
    %113 = vector.load %arg14[%c0_51, %c0_52, %c0_53] : memref<1x16x128xf32, #tpu.memory_space<vmem>>, vector<1x16x128xf32>
    %114 = vector.shape_cast %113 : vector<1x16x128xf32> to vector<16x128xf32>
    %115 = vector.shape_cast %112 : vector<16x128xf32> to vector<1x16x128xf32>
    tpu.vector_store %arg14[%c0_51, %c0_52, %c0_53], %115 {strides = array<i32>} : memref<1x16x128xf32, #tpu.memory_space<vmem>>, vector<1x16x128xf32>,
    return
  }
  func.func @transform_0(%arg0: i32) -> (i32, i32, i32) {
    %c0_i32 = arith.constant 0 : i32
    %c0_i32_0 = arith.constant 0 : i32
    %c0_i32_1 = arith.constant 0 : i32
    return %arg0, %c0_i32, %c0_i32_0 : i32, i32, i32
  }
  func.func @transform_1(%arg0: i32) -> (i32, i32) {
    %c0_i32 = arith.constant 0 : i32
    %c0_i32_0 = arith.constant 0 : i32
    %c0_i32_1 = arith.constant 0 : i32
    return %c0_i32, %c0_i32_0 : i32, i32
  }
  func.func @transform_2(%arg0: i32) -> (i32, i32) {
    %c0_i32 = arith.constant 0 : i32
    %c0_i32_0 = arith.constant 0 : i32
    %c0_i32_1 = arith.constant 0 : i32
    return %c0_i32, %c0_i32_0 : i32, i32
  }
  func.func @transform_3(%arg0: i32) -> (i32, i32) {
    %c0_i32 = arith.constant 0 : i32
    %c0_i32_0 = arith.constant 0 : i32
    %c0_i32_1 = arith.constant 0 : i32
    return %c0_i32, %c0_i32_0 : i32, i32
  }
  func.func @transform_4(%arg0: i32) -> (i32, i32, i32) {
    %c0_i32 = arith.constant 0 : i32
    %c0_i32_0 = arith.constant 0 : i32
    %c0_i32_1 = arith.constant 0 : i32
    %c0_i32_2 = arith.constant 0 : i32
    return %c0_i32, %c0_i32_0, %c0_i32_1 : i32, i32, i32
  }
  func.func @transform_5(%arg0: i32) -> (i32, i32) {
    %c0_i32 = arith.constant 0 : i32
    %c0_i32_0 = arith.constant 0 : i32
    %c0_i32_1 = arith.constant 0 : i32
    return %c0_i32, %c0_i32_0 : i32, i32
  }
  func.func @transform_6(%arg0: i32) -> (i32, i32) {
    %c0_i32 = arith.constant 0 : i32
    %c0_i32_0 = arith.constant 0 : i32
    %c0_i32_1 = arith.constant 0 : i32
    return %c0_i32, %c0_i32_0 : i32, i32
  }
  func.func @transform_7(%arg0: i32) -> (i32, i32) {
    %c0_i32 = arith.constant 0 : i32
    %c0_i32_0 = arith.constant 0 : i32
    %c0_i32_1 = arith.constant 0 : i32
    return %c0_i32, %c0_i32_0 : i32, i32
  }
  func.func @transform_8(%arg0: i32) -> (i32, i32) {
    %c0_i32 = arith.constant 0 : i32
    %c0_i32_0 = arith.constant 0 : i32
    %c0_i32_1 = arith.constant 0 : i32
    return %c0_i32, %c0_i32_0 : i32, i32
  }
  func.func @transform_9(%arg0: i32) -> (i32, i32) {
    %c0_i32 = arith.constant 0 : i32
    %c0_i32_0 = arith.constant 0 : i32
    %c0_i32_1 = arith.constant 0 : i32
    return %c0_i32, %c0_i32_0 : i32, i32
  }
  func.func @transform_10(%arg0: i32) -> (i32, i32) {
    %c0_i32 = arith.constant 0 : i32
    %c0_i32_0 = arith.constant 0 : i32
    %c0_i32_1 = arith.constant 0 : i32
    return %c0_i32, %c0_i32_0 : i32, i32
  }
  func.func @transform_11(%arg0: i32) -> (i32, i32) {
    %c0_i32 = arith.constant 0 : i32
    %c0_i32_0 = arith.constant 0 : i32
    %c0_i32_1 = arith.constant 0 : i32
    return %c0_i32, %c0_i32_0 : i32, i32
  }
  func.func @transform_12(%arg0: i32) -> (i32, i32) {
    %c0_i32 = arith.constant 0 : i32
    %c0_i32_0 = arith.constant 0 : i32
    %c0_i32_1 = arith.constant 0 : i32
    return %c0_i32, %c0_i32_0 : i32, i32
  }
  func.func @transform_13(%arg0: i32) -> (i32, i32, i32) {
    %c0_i32 = arith.constant 0 : i32
    %c0_i32_0 = arith.constant 0 : i32
    %c0_i32_1 = arith.constant 0 : i32
    return %arg0, %c0_i32, %c0_i32_0 : i32, i32, i32
  }
}

module attributes {stable_mosaic.version = 11 : i64} {
  func.func @_logits_kernel(%arg0: i32, %arg1: i32, %arg2: memref<32x128xbf16, #tpu.memory_space<vmem>>, %arg3: memref<128x512xbf16, #tpu.memory_space<vmem>>, %arg4: memref<1x512xf32, #tpu.memory_space<vmem>>, %arg5: memref<32x512xf32, #tpu.memory_space<vmem>>) attributes {dimension_semantics = [#tpu.dimension_semantics<parallel>, #tpu.dimension_semantics<parallel>], iteration_bounds = array<i64: 1, 1>, scalar_prefetch = 0 : i64, scratch_operands = 0 : i64, tpu.core_type = #tpu.core_type<tc>, window_params = [{transform_indices = @transform_0, window_bounds = array<i64: 32, 128>}, {transform_indices = @transform_1, window_bounds = array<i64: 128, 512>}, {transform_indices = @transform_2, window_bounds = array<i64: 1, 512>}, {transform_indices = @transform_3, window_bounds = array<i64: 32, 512>}]} {
    %c0 = arith.constant 0 : index
    %c0_0 = arith.constant 0 : index
    %0 = vector.load %arg2[%c0, %c0_0] : memref<32x128xbf16, #tpu.memory_space<vmem>>, vector<32x128xbf16>
    %c0_1 = arith.constant 0 : index
    %c0_2 = arith.constant 0 : index
    %1 = vector.load %arg3[%c0_1, %c0_2] : memref<128x512xbf16, #tpu.memory_space<vmem>>, vector<128x512xbf16>
    %cst = arith.constant dense<0.000000e+00> : vector<32x512xf32>
    %2 = tpu.matmul %0, %1, %cst {dimension_numbers = #tpu.dot_dimension_numbers<[1], [0], [0], [1], [0, 0, 1, 1], [], []>} : vector<32x128xbf16>, vector<128x512xbf16>, vector<32x512xf32> -> vector<32x512xf32>
    %c0_3 = arith.constant 0 : index
    %c0_4 = arith.constant 0 : index
    %3 = vector.load %arg4[%c0_3, %c0_4] : memref<1x512xf32, #tpu.memory_space<vmem>>, vector<1x512xf32>
    %4 = vector.broadcast %3 : vector<1x512xf32> to vector<32x512xf32>
    %5 = arith.addf %2, %4 : vector<32x512xf32>
    %c0_5 = arith.constant 0 : index
    %c0_6 = arith.constant 0 : index
    %6 = vector.load %arg5[%c0_5, %c0_6] : memref<32x512xf32, #tpu.memory_space<vmem>>, vector<32x512xf32>
    tpu.vector_store %arg5[%c0_5, %c0_6], %5 {strides = array<i32>} : memref<32x512xf32, #tpu.memory_space<vmem>>, vector<32x512xf32>,
    return
  }
  func.func @transform_0(%arg0: i32, %arg1: i32) -> (i32, i32) {
    %c0_i32 = arith.constant 0 : i32
    %c0_i32_0 = arith.constant 0 : i32
    return %arg1, %c0_i32 : i32, i32
  }
  func.func @transform_1(%arg0: i32, %arg1: i32) -> (i32, i32) {
    %c0_i32 = arith.constant 0 : i32
    %c0_i32_0 = arith.constant 0 : i32
    return %c0_i32, %arg0 : i32, i32
  }
  func.func @transform_2(%arg0: i32, %arg1: i32) -> (i32, i32) {
    %c0_i32 = arith.constant 0 : i32
    %c0_i32_0 = arith.constant 0 : i32
    return %c0_i32, %arg0 : i32, i32
  }
  func.func @transform_3(%arg0: i32, %arg1: i32) -> (i32, i32) {
    %c0_i32 = arith.constant 0 : i32
    return %arg1, %arg0 : i32, i32
  }
}

</mosaic_0001>

<llo_original>
// kernel: transformer_forward.5
$region0: #{transformer_forward.5}
  #allocation0 [shape = 'u32[]', space=smem, size = 0x4, offset = 0x4, fixed_abs, tag = 'smem constant byte address 0x4 - core index']
  #allocation1 [shape = 'u32[144,128]{1,0:T(1,128)}', space=vmem, size = 0x12000, scoped, tag = 'internal scratch']
  %s0 = inlined_call_operand.vmem [shape: bf16[32,128], index: 0, kind: input, shape index: {}]
  %s1 = inlined_call_operand.vmem [shape: bf16[128,512], index: 1, kind: input, shape index: {}]
  %s2 = inlined_call_operand.vmem [shape: f32[1,512], index: 2, kind: input, shape index: {}]
  %s3 = inlined_call_operand.hbm [shape: f32[32,512], index: 3, kind: output, shape index: {}]
  %s4 = sld [smem:[#allocation0]]
  $region22: #{transformer_forward.5} parent=0
    _
  %s6 = ssub.s32 1, %s4
  %s7 = scalar_select 0, %s6, %s4
  $region1: #{transformer_forward.5} parent=0
    #allocation2 [shape = 'u8[65536]{0}', space=vmem, size = 0x10000, scoped, tag = 'output window, operand 0, single buffered']
    #allocation3 [shape = 's32[1]{0}', space=sflag, size = 0x4, scoped, tag = 'scoped memory for transformer_forward.5']
    %8 = vsyncpa [#allocation3], 0
    // Predicated region
    $region2: #{transformer_forward.5} parent=1 // pred_check
      _
    $region3: #{transformer_forward.5} parent=1 // pred_check_branch
      %10 = sbr.rel (0) target = $region5
    $region4: #{transformer_forward.5} parent=1 // pred_region
      _
    $region5: #{transformer_forward.5} parent=1 // pred_fallthru
      _
    // Predicated region
    $region6: #{transformer_forward.5} parent=1 // pred_check
      _
    $region7: #{transformer_forward.5} parent=1 // pred_check_branch
      %12 = sbr.rel (0) target = $region9
    $region8: #{transformer_forward.5} parent=1 // pred_region
      _
    $region9: #{transformer_forward.5} parent=1 // pred_fallthru
      _
    // Predicated region
    $region10: #{transformer_forward.5} parent=1 // pred_check
      _
    $region11: #{transformer_forward.5} parent=1 // pred_check_branch
      %14 = sbr.rel (0) target = $region13
    $region12: #{transformer_forward.5} parent=1 // pred_region
      _
    $region13: #{transformer_forward.5} parent=1 // pred_fallthru
      _
    %v16 = vld [vmem:[%s0] sm:$0xf]
    %v17 = vld [vmem:[%s0 + $0x4] sm:$0xf]
    %v18 = vld [vmem:[%s0 + $0x8] sm:$0xf]
    %v19 = vld [vmem:[%s0 + $0xc] sm:$0xf]
    %v20 = vld [vmem:[%s1] sm:$0xff]
    %v21 = vld [vmem:[%s1 + $0x8] sm:$0xff]
    %v22 = vld [vmem:[%s1 + $0x10] sm:$0xff]
    %v23 = vld [vmem:[%s1 + $0x18] sm:$0xff]
    %v24 = vld [vmem:[%s1 + $0x20] sm:$0xff]
    %v25 = vld [vmem:[%s1 + $0x28] sm:$0xff]
    %v26 = vld [vmem:[%s1 + $0x30] sm:$0xff]
    %v27 = vld [vmem:[%s1 + $0x38] sm:$0xff]
    %v28 = vld [vmem:[%s1 + $0x40] sm:$0xff]
    %v29 = vld [vmem:[%s1 + $0x48] sm:$0xff]
    %v30 = vld [vmem:[%s1 + $0x50] sm:$0xff]
    %v31 = vld [vmem:[%s1 + $0x58] sm:$0xff]
    %v32 = vld [vmem:[%s1 + $0x60] sm:$0xff]
    %v33 = vld [vmem:[%s1 + $0x68] sm:$0xff]
    %v34 = vld [vmem:[%s1 + $0x70] sm:$0xff]
    %v35 = vld [vmem:[%s1 + $0x78] sm:$0xff]
    %v36 = vld [vmem:[%s1 + $0x80] sm:$0xff]
    %v37 = vld [vmem:[%s1 + $0x88] sm:$0xff]
    %v38 = vld [vmem:[%s1 + $0x90] sm:$0xff]
    %v39 = vld [vmem:[%s1 + $0x98] sm:$0xff]
    %v40 = vld [vmem:[%s1 + $0xa0] sm:$0xff]
    %v41 = vld [vmem:[%s1 + $0xa8] sm:$0xff]
    %v42 = vld [vmem:[%s1 + $0xb0] sm:$0xff]
    %v43 = vld [vmem:[%s1 + $0xb8] sm:$0xff]
    %v44 = vld [vmem:[%s1 + $0xc0] sm:$0xff]
    %v45 = vld [vmem:[%s1 + $0xc8] sm:$0xff]
    %v46 = vld [vmem:[%s1 + $0xd0] sm:$0xff]
    %v47 = vld [vmem:[%s1 + $0xd8] sm:$0xff]
    %v48 = vld [vmem:[%s1 + $0xe0] sm:$0xff]
    %v49 = vld [vmem:[%s1 + $0xe8] sm:$0xff]
    %v50 = vld [vmem:[%s1 + $0xf0] sm:$0xff]
    %v51 = vld [vmem:[%s1 + $0xf8] sm:$0xff]
    %v52 = vld [vmem:[%s2] sm:$0xf]
    %v54 = vlaneseq
    %v55 = vshrl.u32 %v54, 7
    %v56 = vsub.s32 0, %v55
    %v57 = vrot.slane %v52, %v56
    %v58 = vlaneseq
    %v59 = vshrl.u32 %v58, 7
    %v60 = vsub.s32 1, %v59
    %v61 = vrot.slane %v52, %v60
    %v62 = vlaneseq
    %v63 = vshrl.u32 %v62, 7
    %v64 = vsub.s32 2, %v63
    %v65 = vrot.slane %v52, %v64
    %v66 = vlaneseq
    %v67 = vshrl.u32 %v66, 7
    %v68 = vsub.s32 3, %v67
    %v69 = vrot.slane %v52, %v68
    %v78 = vunpack.c.l.b16 %v16
    %v79 = vunpack.c.l.b16 %v17
    %v80 = vunpack.c.l.b16 %v18
    %v81 = vunpack.c.l.b16 %v19
    %v82 = vpack.c.b16 %v79, %v78
    %v83 = vpack.c.b16 %v81, %v80
    %v118 = vunpack.c.l.b16 %v20
    %v119 = vunpack.c.h.b16 %v20
    %v120 = vunpack.c.l.b16 %v21
    %v121 = vunpack.c.h.b16 %v21
    %v122 = vunpack.c.l.b16 %v22
    %v123 = vunpack.c.h.b16 %v22
    %v124 = vunpack.c.l.b16 %v23
    %v125 = vunpack.c.h.b16 %v23
    %v126 = vunpack.c.l.b16 %v24
    %v127 = vunpack.c.h.b16 %v24
    %v128 = vunpack.c.l.b16 %v25
    %v129 = vunpack.c.h.b16 %v25
    %v130 = vunpack.c.l.b16 %v26
    %v131 = vunpack.c.h.b16 %v26
    %v132 = vunpack.c.l.b16 %v27
    %v133 = vunpack.c.h.b16 %v27
    %v134 = vunpack.c.l.b16 %v28
    %v135 = vunpack.c.h.b16 %v28
    %v136 = vunpack.c.l.b16 %v29
    %v137 = vunpack.c.h.b16 %v29
    %v138 = vunpack.c.l.b16 %v30
    %v139 = vunpack.c.h.b16 %v30
    %v140 = vunpack.c.l.b16 %v31
    %v141 = vunpack.c.h.b16 %v31
    %v142 = vunpack.c.l.b16 %v32
    %v143 = vunpack.c.h.b16 %v32
    %v144 = vunpack.c.l.b16 %v33
    %v145 = vunpack.c.h.b16 %v33
    %v146 = vunpack.c.l.b16 %v34
    %v147 = vunpack.c.h.b16 %v34
    %v148 = vunpack.c.l.b16 %v35
    %v149 = vunpack.c.h.b16 %v35
    %v150 = vunpack.c.l.b16 %v36
    %v151 = vunpack.c.h.b16 %v36
    %v152 = vunpack.c.l.b16 %v37
    %v153 = vunpack.c.h.b16 %v37
    %v154 = vunpack.c.l.b16 %v38
    %v155 = vunpack.c.h.b16 %v38
    %v156 = vunpack.c.l.b16 %v39
    %v157 = vunpack.c.h.b16 %v39
    %v158 = vunpack.c.l.b16 %v40
    %v159 = vunpack.c.h.b16 %v40
    %v160 = vunpack.c.l.b16 %v41
    %v161 = vunpack.c.h.b16 %v41
    %v162 = vunpack.c.l.b16 %v42
    %v163 = vunpack.c.h.b16 %v42
    %v164 = vunpack.c.l.b16 %v43
    %v165 = vunpack.c.h.b16 %v43
    %v166 = vunpack.c.l.b16 %v44
    %v167 = vunpack.c.h.b16 %v44
    %v168 = vunpack.c.l.b16 %v45
    %v169 = vunpack.c.h.b16 %v45
    %v170 = vunpack.c.l.b16 %v46
    %v171 = vunpack.c.h.b16 %v46
    %v172 = vunpack.c.l.b16 %v47
    %v173 = vunpack.c.h.b16 %v47
    %v174 = vunpack.c.l.b16 %v48
    %v175 = vunpack.c.h.b16 %v48
    %v176 = vunpack.c.l.b16 %v49
    %v177 = vunpack.c.h.b16 %v49
    %v178 = vunpack.c.l.b16 %v50
    %v179 = vunpack.c.h.b16 %v50
    %v180 = vunpack.c.l.b16 %v51
    %v181 = vunpack.c.h.b16 %v51
    %v182 = vpack.c.b16 %v122, %v118
    %v183 = vpack.c.b16 %v123, %v119
    %v184 = vpack.c.b16 %v124, %v120
    %v185 = vpack.c.b16 %v125, %v121
    %v186 = vpack.c.b16 %v130, %v126
    %v187 = vpack.c.b16 %v131, %v127
    %v188 = vpack.c.b16 %v132, %v128
    %v189 = vpack.c.b16 %v133, %v129
    %v190 = vpack.c.b16 %v138, %v134
    %v191 = vpack.c.b16 %v139, %v135
    %v192 = vpack.c.b16 %v140, %v136
    %v193 = vpack.c.b16 %v141, %v137
    %v194 = vpack.c.b16 %v146, %v142
    %v195 = vpack.c.b16 %v147, %v143
    %v196 = vpack.c.b16 %v148, %v144
    %v197 = vpack.c.b16 %v149, %v145
    %v198 = vpack.c.b16 %v154, %v150
    %v199 = vpack.c.b16 %v155, %v151
    %v200 = vpack.c.b16 %v156, %v152
    %v201 = vpack.c.b16 %v157, %v153
    %v202 = vpack.c.b16 %v162, %v158
    %v203 = vpack.c.b16 %v163, %v159
    %v204 = vpack.c.b16 %v164, %v160
    %v205 = vpack.c.b16 %v165, %v161
    %v206 = vpack.c.b16 %v170, %v166
    %v207 = vpack.c.b16 %v171, %v167
    %v208 = vpack.c.b16 %v172, %v168
    %v209 = vpack.c.b16 %v173, %v169
    %v210 = vpack.c.b16 %v178, %v174
    %v211 = vpack.c.b16 %v179, %v175
    %v212 = vpack.c.b16 %v180, %v176
    %v213 = vpack.c.b16 %v181, %v177
    %246 = vmatprep.subr.bf16.mxu0 %v183
    %247 = vmatpush1.bf16.msra.mxu0 %v182
    %248 = vmatprep.subr.bf16.mxu0 %v187
    %249 = vmatpush1.bf16.msra.mxu0 %v186
    %250 = vmatprep.subr.bf16.mxu0 %v191
    %251 = vmatpush1.bf16.msra.mxu0 %v190
    %252 = vmatprep.subr.bf16.mxu0 %v195
    %253 = vmatpush1.bf16.msra.mxu0 %v194
    %254 = vmatprep.subr.bf16.mxu0 %v199
    %255 = vmatpush1.bf16.msra.mxu0 %v198
    %256 = vmatprep.subr.bf16.mxu0 %v203
    %257 = vmatpush1.bf16.msra.mxu0 %v202
    %258 = vmatprep.subr.bf16.mxu0 %v207
    %259 = vmatpush1.bf16.msra.mxu0 %v206
    %260 = vmatprep.subr.bf16.mxu0 %v211
    %261 = vmatpush1.bf16.msra.mxu0 %v210
    %262 = vmatprep.subr.bf16.mxu0 0
    %263 = vmatpush1.bf16.msra.mxu0 0
    %264 = vmatprep.subr.bf16.mxu0 0
    %265 = vmatpush1.bf16.msra.mxu0 0
    %266 = vmatprep.subr.bf16.mxu0 0
    %267 = vmatpush1.bf16.msra.mxu0 0
    %268 = vmatprep.subr.bf16.mxu0 0
    %269 = vmatpush1.bf16.msra.mxu0 0
    %270 = vmatprep.subr.bf16.mxu0 0
    %271 = vmatpush1.bf16.msra.mxu0 0
    %272 = vmatprep.subr.bf16.mxu0 0
    %273 = vmatpush1.bf16.msra.mxu0 0
    %274 = vmatprep.subr.bf16.mxu0 0
    %275 = vmatpush1.bf16.msra.mxu0 0
    %276 = vmatprep.subr.bf16.mxu0 0
    %277 = vmatpush1.bf16.msra.mxu0 0
    %278 = vmatprep.mubr.bf16.mxu0 0
    %279 = vmatmul.mubr.bf16.gmra.mrb[0].mxu0 %v82
    %v280 = vpop.f32.mrb[0].mxu0
    %v281 = vadd.f32 %v57, %v280
    %v282 = vpop.f32.mrb[0].mxu0
    %v283 = vadd.f32 %v61, %v282
    %v284 = vpop.f32.mrb[0].mxu0
    %v285 = vadd.f32 %v57, %v284
    %v286 = vpop.f32.mrb[0].mxu0
    %v287 = vadd.f32 %v61, %v286
    %288 = vmatprep.mubr.bf16.mxu0 0
    %289 = vmatmul.mubr.bf16.gmra.mrb[0].mxu0 %v83
    %v290 = vpop.f32.mrb[0].mxu0
    %v291 = vadd.f32 %v57, %v290
    %v292 = vpop.f32.mrb[0].mxu0
    %v293 = vadd.f32 %v61, %v292
    %v294 = vpop.f32.mrb[0].mxu0
    %v295 = vadd.f32 %v57, %v294
    %v296 = vpop.f32.mrb[0].mxu0
    %v297 = vadd.f32 %v61, %v296
    %298 = vdwg.mxu0
    %299 = vmatprep.subr.bf16.mxu0 %v185
    %300 = vmatpush1.bf16.msra.mxu0 %v184
    %301 = vmatprep.subr.bf16.mxu0 %v189
    %302 = vmatpush1.bf16.msra.mxu0 %v188
    %303 = vmatprep.subr.bf16.mxu0 %v193
    %304 = vmatpush1.bf16.msra.mxu0 %v192
    %305 = vmatprep.subr.bf16.mxu0 %v197
    %306 = vmatpush1.bf16.msra.mxu0 %v196
    %307 = vmatprep.subr.bf16.mxu0 %v201
    %308 = vmatpush1.bf16.msra.mxu0 %v200
    %309 = vmatprep.subr.bf16.mxu0 %v205
    %310 = vmatpush1.bf16.msra.mxu0 %v204
    %311 = vmatprep.subr.bf16.mxu0 %v209
    %312 = vmatpush1.bf16.msra.mxu0 %v208
    %313 = vmatprep.subr.bf16.mxu0 %v213
    %314 = vmatpush1.bf16.msra.mxu0 %v212
    %315 = vmatprep.subr.bf16.mxu0 0
    %316 = vmatpush1.bf16.msra.mxu0 0
    %317 = vmatprep.subr.bf16.mxu0 0
    %318 = vmatpush1.bf16.msra.mxu0 0
    %319 = vmatprep.subr.bf16.mxu0 0
    %320 = vmatpush1.bf16.msra.mxu0 0
    %321 = vmatprep.subr.bf16.mxu0 0
    %322 = vmatpush1.bf16.msra.mxu0 0
    %323 = vmatprep.subr.bf16.mxu0 0
    %324 = vmatpush1.bf16.msra.mxu0 0
    %325 = vmatprep.subr.bf16.mxu0 0
    %326 = vmatpush1.bf16.msra.mxu0 0
    %327 = vmatprep.subr.bf16.mxu0 0
    %328 = vmatpush1.bf16.msra.mxu0 0
    %329 = vmatprep.subr.bf16.mxu0 0
    %330 = vmatpush1.bf16.msra.mxu0 0
    %331 = vmatprep.mubr.bf16.mxu0 0
    %332 = vmatmul.mubr.bf16.gmra.mrb[0].mxu0 %v82
    %v333 = vpop.f32.mrb[0].mxu0
    %v334 = vadd.f32 %v65, %v333
    %v335 = vpop.f32.mrb[0].mxu0
    %v336 = vadd.f32 %v69, %v335
    %v337 = vpop.f32.mrb[0].mxu0
    %v338 = vadd.f32 %v65, %v337
    %v339 = vpop.f32.mrb[0].mxu0
    %v340 = vadd.f32 %v69, %v339
    %341 = vmatprep.mubr.bf16.mxu0 0
    %342 = vmatmul.mubr.bf16.gmra.mrb[0].mxu0 %v83
    %v343 = vpop.f32.mrb[0].mxu0
    %v344 = vadd.f32 %v65, %v343
    %v345 = vpop.f32.mrb[0].mxu0
    %v346 = vadd.f32 %v69, %v345
    %v347 = vpop.f32.mrb[0].mxu0
    %v348 = vadd.f32 %v65, %v347
    %v349 = vpop.f32.mrb[0].mxu0
    %v350 = vadd.f32 %v69, %v349
    %351 = vdwg.mxu0
    %352 = vst [vmem:[#allocation2] sm:$0xff] %v281
    %353 = vst [vmem:[#allocation2 + $0x8] sm:$0xff] %v283
    %354 = vst [vmem:[#allocation2 + $0x10] sm:$0xff] %v334
    %355 = vst [vmem:[#allocation2 + $0x18] sm:$0xff] %v336
    %356 = vst [vmem:[#allocation2 + $0x20] sm:$0xff] %v285
    %357 = vst [vmem:[#allocation2 + $0x28] sm:$0xff] %v287
    %358 = vst [vmem:[#allocation2 + $0x30] sm:$0xff] %v338
    %359 = vst [vmem:[#allocation2 + $0x38] sm:$0xff] %v340
    %360 = vst [vmem:[#allocation2 + $0x40] sm:$0xff] %v291
    %361 = vst [vmem:[#allocation2 + $0x48] sm:$0xff] %v293
    %362 = vst [vmem:[#allocation2 + $0x50] sm:$0xff] %v344
    %363 = vst [vmem:[#allocation2 + $0x58] sm:$0xff] %v346
    %364 = vst [vmem:[#allocation2 + $0x60] sm:$0xff] %v295
    %365 = vst [vmem:[#allocation2 + $0x68] sm:$0xff] %v297
    %366 = vst [vmem:[#allocation2 + $0x70] sm:$0xff] %v348
    %367 = vst [vmem:[#allocation2 + $0x78] sm:$0xff] %v350
    // Predicated region
    $region14: #{transformer_forward.5} parent=1 // pred_check
      _
    $region15: #{transformer_forward.5} parent=1 // pred_check_branch
      %369 = sbr.rel (0) target = $region17
    $region16: #{transformer_forward.5} parent=1 // pred_region
      %s371 = ssub.s32 2048, 2048
      %372 = vsyncadd [#allocation3], %s371
      %s373 = sshll.u32 [#allocation2], 4
      %s374 = int_to_ptr.vmem [resolvable:$true] %s373
      %379 = dma.vmem_to_hbm [thread:$0]  %s374, 2048, %s3, [#allocation3], 512, 512, 32
    $region17: #{transformer_forward.5} parent=1 // pred_fallthru
      _
    // Predicated region
    $region18: #{transformer_forward.5} parent=1 // pred_check
      _
    $region19: #{transformer_forward.5} parent=1 // pred_check_branch
      %381 = sbr.rel (0) target = $region21
    $region20: #{transformer_forward.5} parent=1 // pred_region
      %382 = dma.done [#allocation3], 2048
    $region21: #{transformer_forward.5} parent=1 // pred_fallthru
      _
    %383 = vsyncpa [#allocation3], 1

// kernel: transformer_forward.3
$region0: #{transformer_forward.3}
  #allocation0 [shape = 'u32[]', space=smem, size = 0x4, offset = 0x4, fixed_abs, tag = 'smem constant byte address 0x4 - core index']
  #allocation1 [shape = 'u32[144,128]{1,0:T(1,128)}', space=vmem, size = 0x12000, scoped, tag = 'internal scratch']
  %s0 = inlined_call_operand.vmem [shape: f32[2,16,128], index: 0, kind: input, shape index: {}]
  %s1 = inlined_call_operand.vmem [shape: f32[1,128], index: 1, kind: input, shape index: {}]
  %s2 = inlined_call_operand.vmem [shape: f32[1,128], index: 2, kind: input, shape index: {}]
  %s3 = inlined_call_operand.vmem [shape: bf16[128,384], index: 3, kind: input, shape index: {}]
  %s4 = inlined_call_operand.vmem [shape: bf16[2,16,16], index: 4, kind: input, shape index: {}]
  %s5 = inlined_call_operand.vmem [shape: bf16[128,128], index: 5, kind: input, shape index: {}]
  %s6 = inlined_call_operand.vmem [shape: f32[1,128], index: 6, kind: input, shape index: {}]
  %s7 = inlined_call_operand.vmem [shape: f32[1,128], index: 7, kind: input, shape index: {}]
  %s8 = inlined_call_operand.vmem [shape: f32[1,128], index: 8, kind: input, shape index: {}]
  %s9 = inlined_call_operand.vmem [shape: bf16[128,512], index: 9, kind: input, shape index: {}]
  %s10 = inlined_call_operand.vmem [shape: f32[1,512], index: 10, kind: input, shape index: {}]
  %s11 = inlined_call_operand.vmem [shape: bf16[512,128], index: 11, kind: input, shape index: {}]
  %s12 = inlined_call_operand.vmem [shape: f32[1,128], index: 12, kind: input, shape index: {}]
  %s13 = inlined_call_operand.vmem [shape: f32[2,16,128], index: 13, kind: output, shape index: {}]
  %s14 = sld [smem:[#allocation0]]
  $region85: #{transformer_forward.3} parent=0
    _
  %s16 = ssub.s32 1, %s14
  %s17 = scalar_select 0, %s16, %s14
  loop: start=0, step=1, limit=4
  $region2: #{transformer_forward.3} parent=0 // loop_pre_header
    _
  $region3: #{transformer_forward.3} parent=0 // loop_header
    %s19 = sphi 0, %s23
    %p20 = scmp.ge.s32.totalorder %s19, 4
    %s29 = sphi 0, %s31
    %s32 = sphi 0, %s29
    %s33 = sphi 0, %s32
    %s49 = sphi 0, %s33
    %s53 = sphi 0, %s53
    %s55 = sphi 0, %s53
    %s56 = sphi 0, %s55
    %s70 = sphi 0, %s56
    %s74 = sphi 0, %s74
    %s76 = sphi 0, %s74
    %s77 = sphi 0, %s76
    %s91 = sphi 0, %s77
    %s95 = sphi 0, %s95
    %s97 = sphi 0, %s95
    %s98 = sphi 0, %s97
    %s112 = sphi 0, %s98
    %s116 = sphi 0, %s116
    %s118 = sphi 0, %s116
    %s119 = sphi 0, %s118
    %s133 = sphi 0, %s119
    %s137 = sphi 0, %s137
    %s139 = sphi 0, %s137
    %s140 = sphi 0, %s139
    %s154 = sphi 0, %s140
    %s158 = sphi 0, %s158
    %s160 = sphi 0, %s158
    %s161 = sphi 0, %s160
    %s175 = sphi 0, %s161
    %s179 = sphi 0, %s179
    %s181 = sphi 0, %s179
    %s182 = sphi 0, %s181
    %s196 = sphi 0, %s182
    %s200 = sphi 0, %s200
    %s202 = sphi 0, %s200
    %s203 = sphi 0, %s202
    %s217 = sphi 0, %s203
    %s221 = sphi 0, %s221
    %s223 = sphi 0, %s221
    %s224 = sphi 0, %s223
    %s238 = sphi 0, %s224
    %s242 = sphi 0, %s242
    %s244 = sphi 0, %s242
    %s245 = sphi 0, %s244
    %s259 = sphi 0, %s245
    %s263 = sphi 0, %s263
    %s265 = sphi 0, %s263
    %s266 = sphi 0, %s265
    %s280 = sphi 0, %s266
    %s284 = sphi 0, %s284
    %s286 = sphi 0, %s284
    %s287 = sphi 0, %s286
    %s301 = sphi 0, %s287
    %s307 = sphi 0, %s309
    %s310 = sphi 0, %s307
    %s311 = sphi 0, %s310
    %s327 = sphi 0, %s311
  $region4: #{transformer_forward.3} parent=0 // loop_header_branch
    %22 = sbr.rel (%p20) target = $region8
  $region5: #{transformer_forward.3} parent=0 // loop_body
    %s24 = ssub.s32 %s19, 1
    %s25 = ssub.s32 %s19, 2
    %s26 = sadd.s32 %s19, 1
    %s27 = ssub.s32 %s19, %s26
    %p28 = scmp.eq.s32.totalorder %s27, 0
    %s30 = sadd.s32 %s29, 1
    %s31 = scalar_select %p28, %s29, %s30
    %p34 = pneg %p28
    %p35 = scmp.eq.s32.totalorder %s19, 1
    %p36 = por %p34, %p35
    %p37 = scmp.ne.s32.totalorder %s29, %s32
    %p38 = scmp.eq.s32.totalorder %s19, 0
    %p39 = por %p37, %p38
    %p40 = scmp.ne.s32.totalorder %s29, %s32
    %p41 = scmp.eq.s32.totalorder %s24, 1
    %p42 = por %p40, %p41
    %p43 = scmp.ne.s32.totalorder %s32, %s33
    %p44 = scmp.eq.s32.totalorder %s24, 0
    %p45 = por %p43, %p44
    %p46 = scmp.ne.s32.totalorder %s32, %s33
    %p47 = scmp.eq.s32.totalorder %s25, 1
    %p48 = por %p46, %p47
    %p50 = scmp.ne.s32.totalorder %s33, %s49
    %p51 = scmp.eq.s32.totalorder %s25, 0
    %p52 = por %p50, %p51
    %s54 = sadd.s32 %s53, 1
    %p57 = scmp.eq.s32.totalorder %s19, 1
    %p58 = scmp.ne.s32.totalorder %s53, %s55
    %p59 = scmp.eq.s32.totalorder %s19, 0
    %p60 = por %p58, %p59
    %p61 = scmp.ne.s32.totalorder %s53, %s55
    %p62 = scmp.eq.s32.totalorder %s24, 1
    %p63 = por %p61, %p62
    %p64 = scmp.ne.s32.totalorder %s55, %s56
    %p65 = scmp.eq.s32.totalorder %s24, 0
    %p66 = por %p64, %p65
    %p67 = scmp.ne.s32.totalorder %s55, %s56
    %p68 = scmp.eq.s32.totalorder %s25, 1
    %p69 = por %p67, %p68
    %p71 = scmp.ne.s32.totalorder %s56, %s70
    %p72 = scmp.eq.s32.totalorder %s25, 0
    %p73 = por %p71, %p72
    %s75 = sadd.s32 %s74, 1
    %p78 = scmp.eq.s32.totalorder %s19, 1
    %p79 = scmp.ne.s32.totalorder %s74, %s76
    %p80 = scmp.eq.s32.totalorder %s19, 0
    %p81 = por %p79, %p80
    %p82 = scmp.ne.s32.totalorder %s74, %s76
    %p83 = scmp.eq.s32.totalorder %s24, 1
    %p84 = por %p82, %p83
    %p85 = scmp.ne.s32.totalorder %s76, %s77
    %p86 = scmp.eq.s32.totalorder %s24, 0
    %p87 = por %p85, %p86
    %p88 = scmp.ne.s32.totalorder %s76, %s77
    %p89 = scmp.eq.s32.totalorder %s25, 1
    %p90 = por %p88, %p89
    %p92 = scmp.ne.s32.totalorder %s77, %s91
    %p93 = scmp.eq.s32.totalorder %s25, 0
    %p94 = por %p92, %p93
    %s96 = sadd.s32 %s95, 1
    %p99 = scmp.eq.s32.totalorder %s19, 1
    %p100 = scmp.ne.s32.totalorder %s95, %s97
    %p101 = scmp.eq.s32.totalorder %s19, 0
    %p102 = por %p100, %p101
    %p103 = scmp.ne.s32.totalorder %s95, %s97
    %p104 = scmp.eq.s32.totalorder %s24, 1
    %p105 = por %p103, %p104
    %p106 = scmp.ne.s32.totalorder %s97, %s98
    %p107 = scmp.eq.s32.totalorder %s24, 0
    %p108 = por %p106, %p107
    %p109 = scmp.ne.s32.totalorder %s97, %s98
    %p110 = scmp.eq.s32.totalorder %s25, 1
    %p111 = por %p109, %p110
    %p113 = scmp.ne.s32.totalorder %s98, %s112
    %p114 = scmp.eq.s32.totalorder %s25, 0
    %p115 = por %p113, %p114
    %s117 = sadd.s32 %s116, 1
    %p120 = scmp.eq.s32.totalorder %s19, 1
    %p121 = scmp.ne.s32.totalorder %s116, %s118
    %p122 = scmp.eq.s32.totalorder %s19, 0
    %p123 = por %p121, %p122
    %p124 = scmp.ne.s32.totalorder %s116, %s118
    %p125 = scmp.eq.s32.totalorder %s24, 1
    %p126 = por %p124, %p125
    %p127 = scmp.ne.s32.totalorder %s118, %s119
    %p128 = scmp.eq.s32.totalorder %s24, 0
    %p129 = por %p127, %p128
    %p130 = scmp.ne.s32.totalorder %s118, %s119
    %p131 = scmp.eq.s32.totalorder %s25, 1
    %p132 = por %p130, %p131
    %p134 = scmp.ne.s32.totalorder %s119, %s133
    %p135 = scmp.eq.s32.totalorder %s25, 0
    %p136 = por %p134, %p135
    %s138 = sadd.s32 %s137, 1
    %p141 = scmp.eq.s32.totalorder %s19, 1
    %p142 = scmp.ne.s32.totalorder %s137, %s139
    %p143 = scmp.eq.s32.totalorder %s19, 0
    %p144 = por %p142, %p143
    %p145 = scmp.ne.s32.totalorder %s137, %s139
    %p146 = scmp.eq.s32.totalorder %s24, 1
    %p147 = por %p145, %p146
    %p148 = scmp.ne.s32.totalorder %s139, %s140
    %p149 = scmp.eq.s32.totalorder %s24, 0
    %p150 = por %p148, %p149
    %p151 = scmp.ne.s32.totalorder %s139, %s140
    %p152 = scmp.eq.s32.totalorder %s25, 1
    %p153 = por %p151, %p152
    %p155 = scmp.ne.s32.totalorder %s140, %s154
    %p156 = scmp.eq.s32.totalorder %s25, 0
    %p157 = por %p155, %p156
    %s159 = sadd.s32 %s158, 1
    %p162 = scmp.eq.s32.totalorder %s19, 1
    %p163 = scmp.ne.s32.totalorder %s158, %s160
    %p164 = scmp.eq.s32.totalorder %s19, 0
    %p165 = por %p163, %p164
    %p166 = scmp.ne.s32.totalorder %s158, %s160
    %p167 = scmp.eq.s32.totalorder %s24, 1
    %p168 = por %p166, %p167
    %p169 = scmp.ne.s32.totalorder %s160, %s161
    %p170 = scmp.eq.s32.totalorder %s24, 0
    %p171 = por %p169, %p170
    %p172 = scmp.ne.s32.totalorder %s160, %s161
    %p173 = scmp.eq.s32.totalorder %s25, 1
    %p174 = por %p172, %p173
    %p176 = scmp.ne.s32.totalorder %s161, %s175
    %p177 = scmp.eq.s32.totalorder %s25, 0
    %p178 = por %p176, %p177
    %s180 = sadd.s32 %s179, 1
    %p183 = scmp.eq.s32.totalorder %s19, 1
    %p184 = scmp.ne.s32.totalorder %s179, %s181
    %p185 = scmp.eq.s32.totalorder %s19, 0
    %p186 = por %p184, %p185
    %p187 = scmp.ne.s32.totalorder %s179, %s181
    %p188 = scmp.eq.s32.totalorder %s24, 1
    %p189 = por %p187, %p188
    %p190 = scmp.ne.s32.totalorder %s181, %s182
    %p191 = scmp.eq.s32.totalorder %s24, 0
    %p192 = por %p190, %p191
    %p193 = scmp.ne.s32.totalorder %s181, %s182
    %p194 = scmp.eq.s32.totalorder %s25, 1
    %p195 = por %p193, %p194
    %p197 = scmp.ne.s32.totalorder %s182, %s196
    %p198 = scmp.eq.s32.totalorder %s25, 0
    %p199 = por %p197, %p198
    %s201 = sadd.s32 %s200, 1
    %p204 = scmp.eq.s32.totalorder %s19, 1
    %p205 = scmp.ne.s32.totalorder %s200, %s202
    %p206 = scmp.eq.s32.totalorder %s19, 0
    %p207 = por %p205, %p206
    %p208 = scmp.ne.s32.totalorder %s200, %s202
    %p209 = scmp.eq.s32.totalorder %s24, 1
    %p210 = por %p208, %p209
    %p211 = scmp.ne.s32.totalorder %s202, %s203
    %p212 = scmp.eq.s32.totalorder %s24, 0
    %p213 = por %p211, %p212
    %p214 = scmp.ne.s32.totalorder %s202, %s203
    %p215 = scmp.eq.s32.totalorder %s25, 1
    %p216 = por %p214, %p215
    %p218 = scmp.ne.s32.totalorder %s203, %s217
    %p219 = scmp.eq.s32.totalorder %s25, 0
    %p220 = por %p218, %p219
    %s222 = sadd.s32 %s221, 1
    %p225 = scmp.eq.s32.totalorder %s19, 1
    %p226 = scmp.ne.s32.totalorder %s221, %s223
    %p227 = scmp.eq.s32.totalorder %s19, 0
    %p228 = por %p226, %p227
    %p229 = scmp.ne.s32.totalorder %s221, %s223
    %p230 = scmp.eq.s32.totalorder %s24, 1
    %p231 = por %p229, %p230
    %p232 = scmp.ne.s32.totalorder %s223, %s224
    %p233 = scmp.eq.s32.totalorder %s24, 0
    %p234 = por %p232, %p233
    %p235 = scmp.ne.s32.totalorder %s223, %s224
    %p236 = scmp.eq.s32.totalorder %s25, 1
    %p237 = por %p235, %p236
    %p239 = scmp.ne.s32.totalorder %s224, %s238
    %p240 = scmp.eq.s32.totalorder %s25, 0
    %p241 = por %p239, %p240
    %s243 = sadd.s32 %s242, 1
    %p246 = scmp.eq.s32.totalorder %s19, 1
    %p247 = scmp.ne.s32.totalorder %s242, %s244
    %p248 = scmp.eq.s32.totalorder %s19, 0
    %p249 = por %p247, %p248
    %p250 = scmp.ne.s32.totalorder %s242, %s244
    %p251 = scmp.eq.s32.totalorder %s24, 1
    %p252 = por %p250, %p251
    %p253 = scmp.ne.s32.totalorder %s244, %s245
    %p254 = scmp.eq.s32.totalorder %s24, 0
    %p255 = por %p253, %p254
    %p256 = scmp.ne.s32.totalorder %s244, %s245
    %p257 = scmp.eq.s32.totalorder %s25, 1
    %p258 = por %p256, %p257
    %p260 = scmp.ne.s32.totalorder %s245, %s259
    %p261 = scmp.eq.s32.totalorder %s25, 0
    %p262 = por %p260, %p261
    %s264 = sadd.s32 %s263, 1
    %p267 = scmp.eq.s32.totalorder %s19, 1
    %p268 = scmp.ne.s32.totalorder %s263, %s265
    %p269 = scmp.eq.s32.totalorder %s19, 0
    %p270 = por %p268, %p269
    %p271 = scmp.ne.s32.totalorder %s263, %s265
    %p272 = scmp.eq.s32.totalorder %s24, 1
    %p273 = por %p271, %p272
    %p274 = scmp.ne.s32.totalorder %s265, %s266
    %p275 = scmp.eq.s32.totalorder %s24, 0
    %p276 = por %p274, %p275
    %p277 = scmp.ne.s32.totalorder %s265, %s266
    %p278 = scmp.eq.s32.totalorder %s25, 1
    %p279 = por %p277, %p278
    %p281 = scmp.ne.s32.totalorder %s266, %s280
    %p282 = scmp.eq.s32.totalorder %s25, 0
    %p283 = por %p281, %p282
    %s285 = sadd.s32 %s284, 1
    %p288 = scmp.eq.s32.totalorder %s19, 1
    %p289 = scmp.ne.s32.totalorder %s284, %s286
    %p290 = scmp.eq.s32.totalorder %s19, 0
    %p291 = por %p289, %p290
    %p292 = scmp.ne.s32.totalorder %s284, %s286
    %p293 = scmp.eq.s32.totalorder %s24, 1
    %p294 = por %p292, %p293
    %p295 = scmp.ne.s32.totalorder %s286, %s287
    %p296 = scmp.eq.s32.totalorder %s24, 0
    %p297 = por %p295, %p296
    %p298 = scmp.ne.s32.totalorder %s286, %s287
    %p299 = scmp.eq.s32.totalorder %s25, 1
    %p300 = por %p298, %p299
    %p302 = scmp.ne.s32.totalorder %s287, %s301
    %p303 = scmp.eq.s32.totalorder %s25, 0
    %p304 = por %p302, %p303
    %s305 = ssub.s32 %s19, %s26
    %p306 = scmp.eq.s32.totalorder %s305, 0
    %s308 = sadd.s32 %s307, 1
    %s309 = scalar_select %p306, %s307, %s308
    %p312 = pneg %p306
    %p313 = scmp.eq.s32.totalorder %s19, 1
    %p314 = por %p312, %p313
    %p315 = scmp.ne.s32.totalorder %s307, %s310
    %p316 = scmp.eq.s32.totalorder %s19, 0
    %p317 = por %p315, %p316
    %p318 = scmp.ne.s32.totalorder %s307, %s310
    %p319 = scmp.eq.s32.totalorder %s24, 1
    %p320 = por %p318, %p319
    %p321 = scmp.ne.s32.totalorder %s310, %s311
    %p322 = scmp.eq.s32.totalorder %s24, 0
    %p323 = por %p321, %p322
    %p324 = scmp.ne.s32.totalorder %s310, %s311
    %p325 = scmp.eq.s32.totalorder %s25, 1
    %p326 = por %p324, %p325
    %p328 = scmp.ne.s32.totalorder %s311, %s327
    %p329 = scmp.eq.s32.totalorder %s25, 0
    %p330 = por %p328, %p329
    %p331 = scmp.le.s32.totalorder 1, %s19
    %p332 = scmp.lt.s32.totalorder %s19, 3
    %p333 = pnand %p331, %p332
    %p334 = pneg %p333
    // Predicated region
    $region9: #{transformer_forward.3} parent=5 // pred_check
      _
    $region10: #{transformer_forward.3} parent=5 // pred_check_branch
      %336 = sbr.rel (%p333) target = $region12
    $region11: #{transformer_forward.3} parent=5 // pred_region
      %s337 = ssub.s32 %s19, 1
      // Predicated region
      $region13: #{transformer_forward.3} parent=11 // pred_check
        %p338 = pneg %p66
      $region14: #{transformer_forward.3} parent=11 // pred_check_branch
        %340 = sbr.rel (%p338) target = $region16
      $region15: #{transformer_forward.3} parent=11 // pred_region
        _
      $region16: #{transformer_forward.3} parent=11 // pred_fallthru
        _
      // Predicated region
      $region17: #{transformer_forward.3} parent=11 // pred_check
        %p341 = pneg %p87
      $region18: #{transformer_forward.3} parent=11 // pred_check_branch
        %343 = sbr.rel (%p341) target = $region20
      $region19: #{transformer_forward.3} parent=11 // pred_region
        _
      $region20: #{transformer_forward.3} parent=11 // pred_fallthru
        _
      // Predicated region
      $region21: #{transformer_forward.3} parent=11 // pred_check
        %p344 = pneg %p108
      $region22: #{transformer_forward.3} parent=11 // pred_check_branch
        %346 = sbr.rel (%p344) target = $region24
      $region23: #{transformer_forward.3} parent=11 // pred_region
        _
      $region24: #{transformer_forward.3} parent=11 // pred_fallthru
        _
      // Predicated region
      $region25: #{transformer_forward.3} parent=11 // pred_check
        %p347 = pneg %p129
      $region26: #{transformer_forward.3} parent=11 // pred_check_branch
        %349 = sbr.rel (%p347) target = $region28
      $region27: #{transformer_forward.3} parent=11 // pred_region
        _
      $region28: #{transformer_forward.3} parent=11 // pred_fallthru
        _
      // Predicated region
      $region29: #{transformer_forward.3} parent=11 // pred_check
        %p350 = pneg %p150
      $region30: #{transformer_forward.3} parent=11 // pred_check_branch
        %352 = sbr.rel (%p350) target = $region32
      $region31: #{transformer_forward.3} parent=11 // pred_region
        _
      $region32: #{transformer_forward.3} parent=11 // pred_fallthru
        _
      // Predicated region
      $region33: #{transformer_forward.3} parent=11 // pred_check
        %p353 = pneg %p171
      $region34: #{transformer_forward.3} parent=11 // pred_check_branch
        %355 = sbr.rel (%p353) target = $region36
      $region35: #{transformer_forward.3} parent=11 // pred_region
        _
      $region36: #{transformer_forward.3} parent=11 // pred_fallthru
        _
      // Predicated region
      $region37: #{transformer_forward.3} parent=11 // pred_check
        %p356 = pneg %p192
      $region38: #{transformer_forward.3} parent=11 // pred_check_branch
        %358 = sbr.rel (%p356) target = $region40
      $region39: #{transformer_forward.3} parent=11 // pred_region
        _
      $region40: #{transformer_forward.3} parent=11 // pred_fallthru
        _
      // Predicated region
      $region41: #{transformer_forward.3} parent=11 // pred_check
        %p359 = pneg %p213
      $region42: #{transformer_forward.3} parent=11 // pred_check_branch
        %361 = sbr.rel (%p359) target = $region44
      $region43: #{transformer_forward.3} parent=11 // pred_region
        _
      $region44: #{transformer_forward.3} parent=11 // pred_fallthru
        _
      // Predicated region
      $region45: #{transformer_forward.3} parent=11 // pred_check
        %p362 = pneg %p234
      $region46: #{transformer_forward.3} parent=11 // pred_check_branch
        %364 = sbr.rel (%p362) target = $region48
      $region47: #{transformer_forward.3} parent=11 // pred_region
        _
      $region48: #{transformer_forward.3} parent=11 // pred_fallthru
        _
      // Predicated region
      $region49: #{transformer_forward.3} parent=11 // pred_check
        %p365 = pneg %p255
      $region50: #{transformer_forward.3} parent=11 // pred_check_branch
        %367 = sbr.rel (%p365) target = $region52
      $region51: #{transformer_forward.3} parent=11 // pred_region
        _
      $region52: #{transformer_forward.3} parent=11 // pred_fallthru
        _
      // Predicated region
      $region53: #{transformer_forward.3} parent=11 // pred_check
        %p368 = pneg %p276
      $region54: #{transformer_forward.3} parent=11 // pred_check_branch
        %370 = sbr.rel (%p368) target = $region56
      $region55: #{transformer_forward.3} parent=11 // pred_region
        _
      $region56: #{transformer_forward.3} parent=11 // pred_fallthru
        _
      // Predicated region
      $region57: #{transformer_forward.3} parent=11 // pred_check
        %p371 = pneg %p297
      $region58: #{transformer_forward.3} parent=11 // pred_check_branch
        %373 = sbr.rel (%p371) target = $region60
      $region59: #{transformer_forward.3} parent=11 // pred_region
        _
      $region60: #{transformer_forward.3} parent=11 // pred_fallthru
        _
    $region12: #{transformer_forward.3} parent=5 // pred_fallthru
      _
    %p374 = scmp.lt.s32.totalorder %s19, 2
    // Predicated region
    $region61: #{transformer_forward.3} parent=5 // pred_check
      %p375 = pneg %p374
    $region62: #{transformer_forward.3} parent=5 // pred_check_branch
      %377 = sbr.rel (%p375) target = $region64
    $region63: #{transformer_forward.3} parent=5 // pred_region
      // Predicated region
      $region65: #{transformer_forward.3} parent=63 // pred_check
        %p378 = pneg %p39
      $region66: #{transformer_forward.3} parent=63 // pred_check_branch
        %380 = sbr.rel (%p378) target = $region68
      $region67: #{transformer_forward.3} parent=63 // pred_region
        %p381 = scmp.lt.s32.totalorder %s19, 1
        %s382 = scalar_select %p381, %s19, 1
        %s383 = smul.addr %s382, 2
        %s384 = smul.addr %s383, 8
        %s385 = scalar_lea.vmem %s0, %s384
      $region68: #{transformer_forward.3} parent=63 // pred_fallthru
        _
    $region64: #{transformer_forward.3} parent=5 // pred_fallthru
      _
    %p386 = scmp.le.s32.totalorder 1, %s19
    %p387 = scmp.lt.s32.totalorder %s19, 3
    %p388 = pnand %p386, %p387
    %p389 = pneg %p388
    // Predicated region
    $region69: #{transformer_forward.3} parent=5 // pred_check
      _
    $region70: #{transformer_forward.3} parent=5 // pred_check_branch
      %391 = sbr.rel (%p388) target = $region72
    $region71: #{transformer_forward.3} parent=5 // pred_region
      %s392 = ssub.s32 %s19, 1
      %p393 = scmp.lt.s32.totalorder %s24, 1
      %s394 = scalar_select %p393, %s24, 1
      %s395 = smul.addr %s394, 2
      %s396 = smul.addr %s395, 8
      %s397 = scalar_lea.vmem %s0, %s396
      %p398 = pneg %p45
      %p399 = pneg %p42
      %p400 = pneg %p66
      %p401 = pneg %p63
      %p402 = pneg %p87
      %p403 = pneg %p84
      %p404 = pneg %p108
      %p405 = pneg %p105
      %p406 = pneg %p129
      %p407 = pneg %p126
      %p408 = pneg %p150
      %p409 = pneg %p147
      %p410 = pneg %p171
      %p411 = pneg %p168
      %p412 = pneg %p192
      %p413 = pneg %p189
      %p414 = pneg %p213
      %p415 = pneg %p210
      %p416 = pneg %p234
      %p417 = pneg %p231
      %p418 = pneg %p255
      %p419 = pneg %p252
      %p420 = pneg %p276
      %p421 = pneg %p273
      %p422 = pneg %p297
      %p423 = pneg %p294
      %p424 = pneg %p323
      %p425 = pneg %p320
      %p426 = scmp.lt.s32.totalorder %s24, 1
      %s427 = scalar_select %p426, %s24, 1
      %s428 = smul.addr %s427, 2
      %s429 = smul.addr %s428, 8
      %s430 = scalar_lea.vmem %s13, %s429
      %p431 = scmp.lt.s32.totalorder %s24, 1
      %s432 = scalar_select %p431, %s24, 1
      %s433 = smul.addr %s432, 2
      %s434 = smul.addr %s433, 8
      %s435 = scalar_lea.vmem %s0, %s434
      %p436 = scmp.lt.s32.totalorder %s24, 1
      %s437 = scalar_select %p436, %s24, 1
      %s438 = smul.addr %s437, 2
      %s439 = smul.addr %s438, 8
      %s440 = scalar_lea.vmem %s13, %s439
      %v442 = vld [vmem:[%s435] sm:$0xff]
      %v443 = vld [vmem:[%s435 + $0x8] sm:$0xff]
      %v444 = vld [vmem:[%s1] sm:$0x1]
      %v445 = vld [vmem:[%s2] sm:$0x1]
      %446 = vadd.xlane.f32.xlu0 %v442
      %v447 = vpop.xlane.xlu0 %446
      %448 = vadd.xlane.f32.xlu0 %v443
      %v449 = vpop.xlane.xlu0 %448
      %v450 = vrcp.pop 128.0
      %v451 = vmul.f32 %v447, %v450
      %v452 = vmul.f32 %v449, %v450
      %v453 = vsub.f32 %v442, %v451
      %v454 = vsub.f32 %v443, %v452
      %v455 = vmul.f32 %v453, %v453
      %v456 = vmul.f32 %v454, %v454
      %457 = vadd.xlane.f32.xlu0 %v455
      %v458 = vpop.xlane.xlu0 %457
      %459 = vadd.xlane.f32.xlu0 %v456
      %v460 = vpop.xlane.xlu0 %459
      %v461 = vmul.f32 %v458, %v450
      %v462 = vmul.f32 %v460, %v450
      %v463 = vadd.f32 %v461, 1e-05
      %v464 = vadd.f32 %v462, 1e-05
      %v465 = vrsqrt.pop %v463
      %v466 = vrsqrt.pop %v464
      %v467 = vmul.f32 %v453, %v465
      %v468 = vmul.f32 %v454, %v466
      %v470 = vlaneseq
      %v471 = vshrl.u32 %v470, 7
      %v472 = vsub.s32 0, %v471
      %v473 = vrot.slane %v444, %v472
      %v475 = vmul.f32 %v467, %v473
      %v476 = vmul.f32 %v468, %v473
      %v478 = vlaneseq
      %v479 = vshrl.u32 %v478, 7
      %v480 = vsub.s32 0, %v479
      %v481 = vrot.slane %v445, %v480
      %v483 = vadd.f32 %v475, %v481
      %v484 = vadd.f32 %v476, %v481
      %v485 = vpack.c.bf16 %v484, %v483
      %v486 = vld [vmem:[%s3] sm:$0xff]
      %v487 = vld [vmem:[%s3 + $0x8] sm:$0xf]
      %v488 = vld [vmem:[%s3 + $0xc] sm:$0xff]
      %v489 = vld [vmem:[%s3 + $0x14] sm:$0xf]
      %v490 = vld [vmem:[%s3 + $0x18] sm:$0xff]
      %v491 = vld [vmem:[%s3 + $0x20] sm:$0xf]
      %v492 = vld [vmem:[%s3 + $0x24] sm:$0xff]
      %v493 = vld [vmem:[%s3 + $0x2c] sm:$0xf]
      %v494 = vld [vmem:[%s3 + $0x30] sm:$0xff]
      %v495 = vld [vmem:[%s3 + $0x38] sm:$0xf]
      %v496 = vld [vmem:[%s3 + $0x3c] sm:$0xff]
      %v497 = vld [vmem:[%s3 + $0x44] sm:$0xf]
      %v498 = vld [vmem:[%s3 + $0x48] sm:$0xff]
      %v499 = vld [vmem:[%s3 + $0x50] sm:$0xf]
      %v500 = vld [vmem:[%s3 + $0x54] sm:$0xff]
      %v501 = vld [vmem:[%s3 + $0x5c] sm:$0xf]
      %v502 = vld [vmem:[%s3 + $0x60] sm:$0xff]
      %v503 = vld [vmem:[%s3 + $0x68] sm:$0xf]
      %v504 = vld [vmem:[%s3 + $0x6c] sm:$0xff]
      %v505 = vld [vmem:[%s3 + $0x74] sm:$0xf]
      %v506 = vld [vmem:[%s3 + $0x78] sm:$0xff]
      %v507 = vld [vmem:[%s3 + $0x80] sm:$0xf]
      %v508 = vld [vmem:[%s3 + $0x84] sm:$0xff]
      %v509 = vld [vmem:[%s3 + $0x8c] sm:$0xf]
      %v510 = vld [vmem:[%s3 + $0x90] sm:$0xff]
      %v511 = vld [vmem:[%s3 + $0x98] sm:$0xf]
      %v512 = vld [vmem:[%s3 + $0x9c] sm:$0xff]
      %v513 = vld [vmem:[%s3 + $0xa4] sm:$0xf]
      %v514 = vld [vmem:[%s3 + $0xa8] sm:$0xff]
      %v515 = vld [vmem:[%s3 + $0xb0] sm:$0xf]
      %v516 = vld [vmem:[%s3 + $0xb4] sm:$0xff]
      %v517 = vld [vmem:[%s3 + $0xbc] sm:$0xf]
      %v550 = vunpack.c.l.b16 %v486
      %v551 = vunpack.c.h.b16 %v486
      %v552 = vunpack.c.l.b16 %v487
      %v553 = vunpack.c.l.b16 %v488
      %v554 = vunpack.c.h.b16 %v488
      %v555 = vunpack.c.l.b16 %v489
      %v556 = vunpack.c.l.b16 %v490
      %v557 = vunpack.c.h.b16 %v490
      %v558 = vunpack.c.l.b16 %v491
      %v559 = vunpack.c.l.b16 %v492
      %v560 = vunpack.c.h.b16 %v492
      %v561 = vunpack.c.l.b16 %v493
      %v562 = vunpack.c.l.b16 %v494
      %v563 = vunpack.c.h.b16 %v494
      %v564 = vunpack.c.l.b16 %v495
      %v565 = vunpack.c.l.b16 %v496
      %v566 = vunpack.c.h.b16 %v496
      %v567 = vunpack.c.l.b16 %v497
      %v568 = vunpack.c.l.b16 %v498
      %v569 = vunpack.c.h.b16 %v498
      %v570 = vunpack.c.l.b16 %v499
      %v571 = vunpack.c.l.b16 %v500
      %v572 = vunpack.c.h.b16 %v500
      %v573 = vunpack.c.l.b16 %v501
      %v574 = vunpack.c.l.b16 %v502
      %v575 = vunpack.c.h.b16 %v502
      %v576 = vunpack.c.l.b16 %v503
      %v577 = vunpack.c.l.b16 %v504
      %v578 = vunpack.c.h.b16 %v504
      %v579 = vunpack.c.l.b16 %v505
      %v580 = vunpack.c.l.b16 %v506
      %v581 = vunpack.c.h.b16 %v506
      %v582 = vunpack.c.l.b16 %v507
      %v583 = vunpack.c.l.b16 %v508
      %v584 = vunpack.c.h.b16 %v508
      %v585 = vunpack.c.l.b16 %v509
      %v586 = vunpack.c.l.b16 %v510
      %v587 = vunpack.c.h.b16 %v510
      %v588 = vunpack.c.l.b16 %v511
      %v589 = vunpack.c.l.b16 %v512
      %v590 = vunpack.c.h.b16 %v512
      %v591 = vunpack.c.l.b16 %v513
      %v592 = vunpack.c.l.b16 %v514
      %v593 = vunpack.c.h.b16 %v514
      %v594 = vunpack.c.l.b16 %v515
      %v595 = vunpack.c.l.b16 %v516
      %v596 = vunpack.c.h.b16 %v516
      %v597 = vunpack.c.l.b16 %v517
      %v598 = vpack.c.b16 %v553, %v550
      %v599 = vpack.c.b16 %v554, %v551
      %v600 = vpack.c.b16 %v555, %v552
      %v601 = vpack.c.b16 %v559, %v556
      %v602 = vpack.c.b16 %v560, %v557
      %v603 = vpack.c.b16 %v561, %v558
      %v604 = vpack.c.b16 %v565, %v562
      %v605 = vpack.c.b16 %v566, %v563
      %v606 = vpack.c.b16 %v567, %v564
      %v607 = vpack.c.b16 %v571, %v568
      %v608 = vpack.c.b16 %v572, %v569
      %v609 = vpack.c.b16 %v573, %v570
      %v610 = vpack.c.b16 %v577, %v574
      %v611 = vpack.c.b16 %v578, %v575
      %v612 = vpack.c.b16 %v579, %v576
      %v613 = vpack.c.b16 %v583, %v580
      %v614 = vpack.c.b16 %v584, %v581
      %v615 = vpack.c.b16 %v585, %v582
      %v616 = vpack.c.b16 %v589, %v586
      %v617 = vpack.c.b16 %v590, %v587
      %v618 = vpack.c.b16 %v591, %v588
      %v619 = vpack.c.b16 %v595, %v592
      %v620 = vpack.c.b16 %v596, %v593
      %v621 = vpack.c.b16 %v597, %v594
      %646 = vmatprep.subr.bf16.mxu0 %v599
      %647 = vmatpush1.bf16.msra.mxu0 %v598
      %648 = vmatprep.subr.bf16.mxu0 %v602
      %649 = vmatpush1.bf16.msra.mxu0 %v601
      %650 = vmatprep.subr.bf16.mxu0 %v605
      %651 = vmatpush1.bf16.msra.mxu0 %v604
      %652 = vmatprep.subr.bf16.mxu0 %v608
      %653 = vmatpush1.bf16.msra.mxu0 %v607
      %654 = vmatprep.subr.bf16.mxu0 %v611
      %655 = vmatpush1.bf16.msra.mxu0 %v610
      %656 = vmatprep.subr.bf16.mxu0 %v614
      %657 = vmatpush1.bf16.msra.mxu0 %v613
      %658 = vmatprep.subr.bf16.mxu0 %v617
      %659 = vmatpush1.bf16.msra.mxu0 %v616
      %660 = vmatprep.subr.bf16.mxu0 %v620
      %661 = vmatpush1.bf16.msra.mxu0 %v619
      %662 = vmatprep.subr.bf16.mxu0 0
      %663 = vmatpush1.bf16.msra.mxu0 0
      %664 = vmatprep.subr.bf16.mxu0 0
      %665 = vmatpush1.bf16.msra.mxu0 0
      %666 = vmatprep.subr.bf16.mxu0 0
      %667 = vmatpush1.bf16.msra.mxu0 0
      %668 = vmatprep.subr.bf16.mxu0 0
      %669 = vmatpush1.bf16.msra.mxu0 0
      %670 = vmatprep.subr.bf16.mxu0 0
      %671 = vmatpush1.bf16.msra.mxu0 0
      %672 = vmatprep.subr.bf16.mxu0 0
      %673 = vmatpush1.bf16.msra.mxu0 0
      %674 = vmatprep.subr.bf16.mxu0 0
      %675 = vmatpush1.bf16.msra.mxu0 0
      %676 = vmatprep.subr.bf16.mxu0 0
      %677 = vmatpush1.bf16.msra.mxu0 0
      %678 = vmatprep.mubr.bf16.mxu0 0
      %679 = vmatmul.mubr.bf16.gmra.mrb[0].mxu0 %v485
      %v680 = vpop.f32.mrb[0].mxu0
      %v681 = vadd.f32 0.0, %v680
      %v682 = vpop.f32.mrb[0].mxu0
      %v683 = vadd.f32 0.0, %v682
      %v684 = vpop.f32.mrb[0].mxu0
      %v685 = vadd.f32 0.0, %v684
      %v686 = vpop.f32.mrb[0].mxu0
      %v687 = vadd.f32 0.0, %v686
      %688 = vdwg.mxu0
      %689 = vmatprep.subr.bf16.mxu0 0
      %690 = vmatpush1.bf16.msra.mxu0 %v600
      %691 = vmatprep.subr.bf16.mxu0 0
      %692 = vmatpush1.bf16.msra.mxu0 %v603
      %693 = vmatprep.subr.bf16.mxu0 0
      %694 = vmatpush1.bf16.msra.mxu0 %v606
      %695 = vmatprep.subr.bf16.mxu0 0
      %696 = vmatpush1.bf16.msra.mxu0 %v609
      %697 = vmatprep.subr.bf16.mxu0 0
      %698 = vmatpush1.bf16.msra.mxu0 %v612
      %699 = vmatprep.subr.bf16.mxu0 0
      %700 = vmatpush1.bf16.msra.mxu0 %v615
      %701 = vmatprep.subr.bf16.mxu0 0
      %702 = vmatpush1.bf16.msra.mxu0 %v618
      %703 = vmatprep.subr.bf16.mxu0 0
      %704 = vmatpush1.bf16.msra.mxu0 %v621
      %705 = vmatprep.subr.bf16.mxu0 0
      %706 = vmatpush1.bf16.msra.mxu0 0
      %707 = vmatprep.subr.bf16.mxu0 0
      %708 = vmatpush1.bf16.msra.mxu0 0
      %709 = vmatprep.subr.bf16.mxu0 0
      %710 = vmatpush1.bf16.msra.mxu0 0
      %711 = vmatprep.subr.bf16.mxu0 0
      %712 = vmatpush1.bf16.msra.mxu0 0
      %713 = vmatprep.subr.bf16.mxu0 0
      %714 = vmatpush1.bf16.msra.mxu0 0
      %715 = vmatprep.subr.bf16.mxu0 0
      %716 = vmatpush1.bf16.msra.mxu0 0
      %717 = vmatprep.subr.bf16.mxu0 0
      %718 = vmatpush1.bf16.msra.mxu0 0
      %719 = vmatprep.subr.bf16.mxu0 0
      %720 = vmatpush1.bf16.msra.mxu0 0
      %721 = vmatprep.mubr.bf16.mxu0 0
      %722 = vmatmul.mubr.bf16.gmra.mrb[0].mxu0 %v485
      %v723 = vpop.f32.mrb[0].mxu0
      %v724 = vadd.f32 0.0, %v723
      %v725 = vpop.f32.mrb[0].mxu0
      %v726 = vpop.f32.mrb[0].mxu0
      %v727 = vadd.f32 0.0, %v726
      %v728 = vpop.f32.mrb[0].mxu0
      %729 = vdwg.mxu0
      %v730 = vpack.c.bf16 %v685, %v681
      %v731 = vpack.c.bf16 %v687, %v683
      %v732 = vpack.c.bf16 %v727, %v724
      %v733 = vld [vmem:[%s4] sm:$0xf]
      %v734 = vld [vmem:[%s4 + $0x4] sm:$0xf]
      %v735 = vunpack.c.l.bf16 %v733
      %v736 = vunpack.c.l.bf16 %v734
      %vm737 = vcmask 523264
      %v739 = vsel %vm737, %v730, 0
      %v742 = vsel %vm737, %v731, 0
      %744 = vmatprep.subr.bf16.mxu0 0
      %745 = vmatpush1.bf16.xpose.msra.mxu0 %v742
      %746 = vmatprep.subr.bf16.mxu0 0
      %747 = vmatpush1.bf16.xpose.msra.mxu0 0
      %748 = vmatprep.subr.bf16.mxu0 0
      %749 = vmatpush1.bf16.xpose.msra.mxu0 0
      %750 = vmatprep.subr.bf16.mxu0 0
      %751 = vmatpush1.bf16.xpose.msra.mxu0 0
      %752 = vmatprep.subr.bf16.mxu0 0
      %753 = vmatpush1.bf16.xpose.msra.mxu0 0
      %754 = vmatprep.subr.bf16.mxu0 0
      %755 = vmatpush1.bf16.xpose.msra.mxu0 0
      %756 = vmatprep.subr.bf16.mxu0 0
      %757 = vmatpush1.bf16.xpose.msra.mxu0 0
      %758 = vmatprep.subr.bf16.mxu0 0
      %759 = vmatpush1.bf16.xpose.msra.mxu0 0
      %760 = vmatprep.subr.bf16.mxu0 0
      %761 = vmatpush1.bf16.xpose.msra.mxu0 0
      %762 = vmatprep.subr.bf16.mxu0 0
      %763 = vmatpush1.bf16.xpose.msra.mxu0 0
      %764 = vmatprep.subr.bf16.mxu0 0
      %765 = vmatpush1.bf16.xpose.msra.mxu0 0
      %766 = vmatprep.subr.bf16.mxu0 0
      %767 = vmatpush1.bf16.xpose.msra.mxu0 0
      %768 = vmatprep.subr.bf16.mxu0 0
      %769 = vmatpush1.bf16.xpose.msra.mxu0 0
      %770 = vmatprep.subr.bf16.mxu0 0
      %771 = vmatpush1.bf16.xpose.msra.mxu0 0
      %772 = vmatprep.subr.bf16.mxu0 0
      %773 = vmatpush1.bf16.xpose.msra.mxu0 0
      %774 = vmatprep.subr.bf16.mxu0 0
      %775 = vmatpush1.bf16.xpose.msra.mxu0 0
      %776 = vmatprep.mubr.bf16.mxu0 0
      %777 = vmatmul.mubr.bf16.gmra.mrb[0].mxu0 %v739
      %v778 = vpop.f32.mrb[0].mxu0
      %v779 = vadd.f32 %v735, %v778
      %v780 = vpop.f32.mrb[0].mxu0
      %v781 = vpop.f32.mrb[0].mxu0
      %v782 = vadd.f32 %v736, %v781
      %v783 = vpop.f32.mrb[0].mxu0
      %784 = vdwg.mxu0
      %vm785 = vcmask 130048
      %v786 = vsel %vm785, %v779, -inf
      %787 = vmax.xlane.f32.xlu0 %v786
      %v788 = vpop.xlane.xlu0 %787
      %v789 = vsel %vm785, %v782, -inf
      %790 = vmax.xlane.f32.xlu0 %v789
      %v791 = vpop.xlane.xlu0 %790
      %v792 = vsub.f32 %v779, %v788
      %v793 = vsub.f32 %v782, %v791
      %v794 = vmul.f32 %v792, 1.442695
      %v795 = vpow.pop %v794
      %v796 = vmul.f32 %v793, 1.442695
      %v797 = vpow.pop %v796
      %v798 = vsel %vm785, %v795, 0.0
      %799 = vadd.xlane.f32.xlu0 %v798
      %v800 = vpop.xlane.xlu0 %799
      %v801 = vsel %vm785, %v797, 0.0
      %802 = vadd.xlane.f32.xlu0 %v801
      %v803 = vpop.xlane.xlu0 %802
      %v804 = vrcp.pop %v800
      %v805 = vrcp.pop %v803
      %v806 = vmul.f32 %v795, %v804
      %v807 = vmul.f32 %v797, %v805
      %v808 = vpack.c.bf16 %v807, %v806
      %v810 = vsel %vm785, %v808, 0
      %812 = vmatprep.subr.bf16.mxu0 0
      %813 = vmatpush1.bf16.msra.mxu0 %v732
      %814 = vmatprep.subr.bf16.mxu0 0
      %815 = vmatpush1.bf16.msra.mxu0 0
      %816 = vmatprep.subr.bf16.mxu0 0
      %817 = vmatpush1.bf16.msra.mxu0 0
      %818 = vmatprep.subr.bf16.mxu0 0
      %819 = vmatpush1.bf16.msra.mxu0 0
      %820 = vmatprep.subr.bf16.mxu0 0
      %821 = vmatpush1.bf16.msra.mxu0 0
      %822 = vmatprep.subr.bf16.mxu0 0
      %823 = vmatpush1.bf16.msra.mxu0 0
      %824 = vmatprep.subr.bf16.mxu0 0
      %825 = vmatpush1.bf16.msra.mxu0 0
      %826 = vmatprep.subr.bf16.mxu0 0
      %827 = vmatpush1.bf16.msra.mxu0 0
      %828 = vmatprep.subr.bf16.mxu0 0
      %829 = vmatpush1.bf16.msra.mxu0 0
      %830 = vmatprep.subr.bf16.mxu0 0
      %831 = vmatpush1.bf16.msra.mxu0 0
      %832 = vmatprep.subr.bf16.mxu0 0
      %833 = vmatpush1.bf16.msra.mxu0 0
      %834 = vmatprep.subr.bf16.mxu0 0
      %835 = vmatpush1.bf16.msra.mxu0 0
      %836 = vmatprep.subr.bf16.mxu0 0
      %837 = vmatpush1.bf16.msra.mxu0 0
      %838 = vmatprep.subr.bf16.mxu0 0
      %839 = vmatpush1.bf16.msra.mxu0 0
      %840 = vmatprep.subr.bf16.mxu0 0
      %841 = vmatpush1.bf16.msra.mxu0 0
      %842 = vmatprep.subr.bf16.mxu0 0
      %843 = vmatpush1.bf16.msra.mxu0 0
      %844 = vmatprep.mubr.bf16.mxu0 0
      %845 = vmatmul.mubr.bf16.gmra.mrb[0].mxu0 %v810
      %v846 = vpop.f32.mrb[0].mxu0
      %v847 = vadd.f32 0.0, %v846
      %v848 = vpop.f32.mrb[0].mxu0
      %v849 = vpop.f32.mrb[0].mxu0
      %v850 = vadd.f32 0.0, %v849
      %v851 = vpop.f32.mrb[0].mxu0
      %852 = vdwg.mxu0
      %s853 = scalar_lea.vmem %s4, 8
      %v854 = vld [vmem:[%s853] sm:$0xf]
      %v855 = vld [vmem:[%s853 + $0x4] sm:$0xf]
      %v856 = vunpack.c.l.bf16 %v854
      %v857 = vunpack.c.l.bf16 %v855
      %859 = vrot.lane.b32.xlu0 %v730, 64
      %v860 = vpop.permute.xlu0 %859
      %862 = vrot.lane.b32.xlu0 %v731, 64
      %v863 = vpop.permute.xlu0 %862
      %v865 = vsel %vm737, %v860, 0
      %v868 = vsel %vm737, %v863, 0
      %870 = vmatprep.subr.bf16.mxu0 0
      %871 = vmatpush1.bf16.xpose.msra.mxu0 %v868
      %872 = vmatprep.subr.bf16.mxu0 0
      %873 = vmatpush1.bf16.xpose.msra.mxu0 0
      %874 = vmatprep.subr.bf16.mxu0 0
      %875 = vmatpush1.bf16.xpose.msra.mxu0 0
      %876 = vmatprep.subr.bf16.mxu0 0
      %877 = vmatpush1.bf16.xpose.msra.mxu0 0
      %878 = vmatprep.subr.bf16.mxu0 0
      %879 = vmatpush1.bf16.xpose.msra.mxu0 0
      %880 = vmatprep.subr.bf16.mxu0 0
      %881 = vmatpush1.bf16.xpose.msra.mxu0 0
      %882 = vmatprep.subr.bf16.mxu0 0
      %883 = vmatpush1.bf16.xpose.msra.mxu0 0
      %884 = vmatprep.subr.bf16.mxu0 0
      %885 = vmatpush1.bf16.xpose.msra.mxu0 0
      %886 = vmatprep.subr.bf16.mxu0 0
      %887 = vmatpush1.bf16.xpose.msra.mxu0 0
      %888 = vmatprep.subr.bf16.mxu0 0
      %889 = vmatpush1.bf16.xpose.msra.mxu0 0
      %890 = vmatprep.subr.bf16.mxu0 0
      %891 = vmatpush1.bf16.xpose.msra.mxu0 0
      %892 = vmatprep.subr.bf16.mxu0 0
      %893 = vmatpush1.bf16.xpose.msra.mxu0 0
      %894 = vmatprep.subr.bf16.mxu0 0
      %895 = vmatpush1.bf16.xpose.msra.mxu0 0
      %896 = vmatprep.subr.bf16.mxu0 0
      %897 = vmatpush1.bf16.xpose.msra.mxu0 0
      %898 = vmatprep.subr.bf16.mxu0 0
      %899 = vmatpush1.bf16.xpose.msra.mxu0 0
      %900 = vmatprep.subr.bf16.mxu0 0
      %901 = vmatpush1.bf16.xpose.msra.mxu0 0
      %902 = vmatprep.mubr.bf16.mxu0 0
      %903 = vmatmul.mubr.bf16.gmra.mrb[0].mxu0 %v865
      %v904 = vpop.f32.mrb[0].mxu0
      %v905 = vadd.f32 %v856, %v904
      %v906 = vpop.f32.mrb[0].mxu0
      %v907 = vpop.f32.mrb[0].mxu0
      %v908 = vadd.f32 %v857, %v907
      %v909 = vpop.f32.mrb[0].mxu0
      %910 = vdwg.mxu0
      %v911 = vsel %vm785, %v905, -inf
      %912 = vmax.xlane.f32.xlu0 %v911
      %v913 = vpop.xlane.xlu0 %912
      %v914 = vsel %vm785, %v908, -inf
      %915 = vmax.xlane.f32.xlu0 %v914
      %v916 = vpop.xlane.xlu0 %915
      %v917 = vsub.f32 %v905, %v913
      %v918 = vsub.f32 %v908, %v916
      %v919 = vmul.f32 %v917, 1.442695
      %v920 = vpow.pop %v919
      %v921 = vmul.f32 %v918, 1.442695
      %v922 = vpow.pop %v921
      %v923 = vsel %vm785, %v920, 0.0
      %924 = vadd.xlane.f32.xlu0 %v923
      %v925 = vpop.xlane.xlu0 %924
      %v926 = vsel %vm785, %v922, 0.0
      %927 = vadd.xlane.f32.xlu0 %v926
      %v928 = vpop.xlane.xlu0 %927
      %v929 = vrcp.pop %v925
      %v930 = vrcp.pop %v928
      %v931 = vmul.f32 %v920, %v929
      %v932 = vmul.f32 %v922, %v930
      %v933 = vpack.c.bf16 %v932, %v931
      %935 = vrot.lane.b32.xlu0 %v732, 64
      %v936 = vpop.permute.xlu0 %935
      %v939 = vsel %vm785, %v933, 0
      %941 = vmatprep.subr.bf16.mxu0 0
      %942 = vmatpush1.bf16.msra.mxu0 %v936
      %943 = vmatprep.subr.bf16.mxu0 0
      %944 = vmatpush1.bf16.msra.mxu0 0
      %945 = vmatprep.subr.bf16.mxu0 0
      %946 = vmatpush1.bf16.msra.mxu0 0
      %947 = vmatprep.subr.bf16.mxu0 0
      %948 = vmatpush1.bf16.msra.mxu0 0
      %949 = vmatprep.subr.bf16.mxu0 0
      %950 = vmatpush1.bf16.msra.mxu0 0
      %951 = vmatprep.subr.bf16.mxu0 0
      %952 = vmatpush1.bf16.msra.mxu0 0
      %953 = vmatprep.subr.bf16.mxu0 0
      %954 = vmatpush1.bf16.msra.mxu0 0
      %955 = vmatprep.subr.bf16.mxu0 0
      %956 = vmatpush1.bf16.msra.mxu0 0
      %957 = vmatprep.subr.bf16.mxu0 0
      %958 = vmatpush1.bf16.msra.mxu0 0
      %959 = vmatprep.subr.bf16.mxu0 0
      %960 = vmatpush1.bf16.msra.mxu0 0
      %961 = vmatprep.subr.bf16.mxu0 0
      %962 = vmatpush1.bf16.msra.mxu0 0
      %963 = vmatprep.subr.bf16.mxu0 0
      %964 = vmatpush1.bf16.msra.mxu0 0
      %965 = vmatprep.subr.bf16.mxu0 0
      %966 = vmatpush1.bf16.msra.mxu0 0
      %967 = vmatprep.subr.bf16.mxu0 0
      %968 = vmatpush1.bf16.msra.mxu0 0
      %969 = vmatprep.subr.bf16.mxu0 0
      %970 = vmatpush1.bf16.msra.mxu0 0
      %971 = vmatprep.subr.bf16.mxu0 0
      %972 = vmatpush1.bf16.msra.mxu0 0
      %973 = vmatprep.mubr.bf16.mxu0 0
      %974 = vmatmul.mubr.bf16.gmra.mrb[0].mxu0 %v939
      %v975 = vpop.f32.mrb[0].mxu0
      %v976 = vadd.f32 0.0, %v975
      %v977 = vpop.f32.mrb[0].mxu0
      %v978 = vpop.f32.mrb[0].mxu0
      %v979 = vadd.f32 0.0, %v978
      %v980 = vpop.f32.mrb[0].mxu0
      %981 = vdwg.mxu0
      %984 = vrot.lane.b32.xlu0 %v976, 64
      %v985 = vpop.permute.xlu0 %984
      %986 = vrot.lane.b32.xlu0 %v979, 64
      %v987 = vpop.permute.xlu0 %986
      %v990 = vsel %vm737, %v847, %v985
      %v991 = vsel %vm737, %v850, %v987
      %v992 = vpack.c.bf16 %v991, %v990
      %v993 = vld [vmem:[%s5] sm:$0xf]
      %v994 = vld [vmem:[%s5 + $0x4] sm:$0xf]
      %v995 = vld [vmem:[%s5 + $0x8] sm:$0xf]
      %v996 = vld [vmem:[%s5 + $0xc] sm:$0xf]
      %v997 = vld [vmem:[%s5 + $0x10] sm:$0xf]
      %v998 = vld [vmem:[%s5 + $0x14] sm:$0xf]
      %v999 = vld [vmem:[%s5 + $0x18] sm:$0xf]
      %v1000 = vld [vmem:[%s5 + $0x1c] sm:$0xf]
      %v1001 = vld [vmem:[%s5 + $0x20] sm:$0xf]
      %v1002 = vld [vmem:[%s5 + $0x24] sm:$0xf]
      %v1003 = vld [vmem:[%s5 + $0x28] sm:$0xf]
      %v1004 = vld [vmem:[%s5 + $0x2c] sm:$0xf]
      %v1005 = vld [vmem:[%s5 + $0x30] sm:$0xf]
      %v1006 = vld [vmem:[%s5 + $0x34] sm:$0xf]
      %v1007 = vld [vmem:[%s5 + $0x38] sm:$0xf]
      %v1008 = vld [vmem:[%s5 + $0x3c] sm:$0xf]
      %v1025 = vunpack.c.l.b16 %v993
      %v1026 = vunpack.c.l.b16 %v994
      %v1027 = vunpack.c.l.b16 %v995
      %v1028 = vunpack.c.l.b16 %v996
      %v1029 = vunpack.c.l.b16 %v997
      %v1030 = vunpack.c.l.b16 %v998
      %v1031 = vunpack.c.l.b16 %v999
      %v1032 = vunpack.c.l.b16 %v1000
      %v1033 = vunpack.c.l.b16 %v1001
      %v1034 = vunpack.c.l.b16 %v1002
      %v1035 = vunpack.c.l.b16 %v1003
      %v1036 = vunpack.c.l.b16 %v1004
      %v1037 = vunpack.c.l.b16 %v1005
      %v1038 = vunpack.c.l.b16 %v1006
      %v1039 = vunpack.c.l.b16 %v1007
      %v1040 = vunpack.c.l.b16 %v1008
      %v1041 = vpack.c.b16 %v1026, %v1025
      %v1042 = vpack.c.b16 %v1028, %v1027
      %v1043 = vpack.c.b16 %v1030, %v1029
      %v1044 = vpack.c.b16 %v1032, %v1031
      %v1045 = vpack.c.b16 %v1034, %v1033
      %v1046 = vpack.c.b16 %v1036, %v1035
      %v1047 = vpack.c.b16 %v1038, %v1037
      %v1048 = vpack.c.b16 %v1040, %v1039
      %1057 = vmatprep.subr.bf16.mxu0 0
      %1058 = vmatpush1.bf16.msra.mxu0 %v1041
      %1059 = vmatprep.subr.bf16.mxu0 0
      %1060 = vmatpush1.bf16.msra.mxu0 %v1042
      %1061 = vmatprep.subr.bf16.mxu0 0
      %1062 = vmatpush1.bf16.msra.mxu0 %v1043
      %1063 = vmatprep.subr.bf16.mxu0 0
      %1064 = vmatpush1.bf16.msra.mxu0 %v1044
      %1065 = vmatprep.subr.bf16.mxu0 0
      %1066 = vmatpush1.bf16.msra.mxu0 %v1045
      %1067 = vmatprep.subr.bf16.mxu0 0
      %1068 = vmatpush1.bf16.msra.mxu0 %v1046
      %1069 = vmatprep.subr.bf16.mxu0 0
      %1070 = vmatpush1.bf16.msra.mxu0 %v1047
      %1071 = vmatprep.subr.bf16.mxu0 0
      %1072 = vmatpush1.bf16.msra.mxu0 %v1048
      %1073 = vmatprep.subr.bf16.mxu0 0
      %1074 = vmatpush1.bf16.msra.mxu0 0
      %1075 = vmatprep.subr.bf16.mxu0 0
      %1076 = vmatpush1.bf16.msra.mxu0 0
      %1077 = vmatprep.subr.bf16.mxu0 0
      %1078 = vmatpush1.bf16.msra.mxu0 0
      %1079 = vmatprep.subr.bf16.mxu0 0
      %1080 = vmatpush1.bf16.msra.mxu0 0
      %1081 = vmatprep.subr.bf16.mxu0 0
      %1082 = vmatpush1.bf16.msra.mxu0 0
      %1083 = vmatprep.subr.bf16.mxu0 0
      %1084 = vmatpush1.bf16.msra.mxu0 0
      %1085 = vmatprep.subr.bf16.mxu0 0
      %1086 = vmatpush1.bf16.msra.mxu0 0
      %1087 = vmatprep.subr.bf16.mxu0 0
      %1088 = vmatpush1.bf16.msra.mxu0 0
      %1089 = vmatprep.mubr.bf16.mxu0 0
      %1090 = vmatmul.mubr.bf16.gmra.mrb[0].mxu0 %v992
      %v1091 = vpop.f32.mrb[0].mxu0
      %v1092 = vadd.f32 0.0, %v1091
      %v1093 = vpop.f32.mrb[0].mxu0
      %v1094 = vpop.f32.mrb[0].mxu0
      %v1095 = vadd.f32 0.0, %v1094
      %v1096 = vpop.f32.mrb[0].mxu0
      %1097 = vdwg.mxu0
      %v1098 = vadd.f32 %v442, %v1092
      %v1099 = vadd.f32 %v443, %v1095
      %v1100 = vld [vmem:[%s6] sm:$0x1]
      %v1102 = vlaneseq
      %v1103 = vshrl.u32 %v1102, 7
      %v1104 = vsub.s32 0, %v1103
      %v1105 = vrot.slane %v1100, %v1104
      %v1107 = vadd.f32 %v1098, %v1105
      %v1108 = vadd.f32 %v1099, %v1105
      %v1109 = vld [vmem:[%s7] sm:$0x1]
      %v1110 = vld [vmem:[%s8] sm:$0x1]
      %1111 = vadd.xlane.f32.xlu0 %v1107
      %v1112 = vpop.xlane.xlu0 %1111
      %1113 = vadd.xlane.f32.xlu0 %v1108
      %v1114 = vpop.xlane.xlu0 %1113
      %v1115 = vmul.f32 %v1112, %v450
      %v1116 = vmul.f32 %v1114, %v450
      %v1117 = vsub.f32 %v1107, %v1115
      %v1118 = vsub.f32 %v1108, %v1116
      %v1119 = vmul.f32 %v1117, %v1117
      %v1120 = vmul.f32 %v1118, %v1118
      %1121 = vadd.xlane.f32.xlu0 %v1119
      %v1122 = vpop.xlane.xlu0 %1121
      %1123 = vadd.xlane.f32.xlu0 %v1120
      %v1124 = vpop.xlane.xlu0 %1123
      %v1125 = vmul.f32 %v1122, %v450
      %v1126 = vmul.f32 %v1124, %v450
      %v1127 = vadd.f32 %v1125, 1e-05
      %v1128 = vadd.f32 %v1126, 1e-05
      %v1129 = vrsqrt.pop %v1127
      %v1130 = vrsqrt.pop %v1128
      %v1131 = vmul.f32 %v1117, %v1129
      %v1132 = vmul.f32 %v1118, %v1130
      %v1134 = vlaneseq
      %v1135 = vshrl.u32 %v1134, 7
      %v1136 = vsub.s32 0, %v1135
      %v1137 = vrot.slane %v1109, %v1136
      %v1139 = vmul.f32 %v1131, %v1137
      %v1140 = vmul.f32 %v1132, %v1137
      %v1142 = vlaneseq
      %v1143 = vshrl.u32 %v1142, 7
      %v1144 = vsub.s32 0, %v1143
      %v1145 = vrot.slane %v1110, %v1144
      %v1147 = vadd.f32 %v1139, %v1145
      %v1148 = vadd.f32 %v1140, %v1145
      %v1149 = vpack.c.bf16 %v1148, %v1147
      %v1150 = vld [vmem:[%s9] sm:$0xff]
      %v1151 = vld [vmem:[%s9 + $0x8] sm:$0xff]
      %v1152 = vld [vmem:[%s9 + $0x10] sm:$0xff]
      %v1153 = vld [vmem:[%s9 + $0x18] sm:$0xff]
      %v1154 = vld [vmem:[%s9 + $0x20] sm:$0xff]
      %v1155 = vld [vmem:[%s9 + $0x28] sm:$0xff]
      %v1156 = vld [vmem:[%s9 + $0x30] sm:$0xff]
      %v1157 = vld [vmem:[%s9 + $0x38] sm:$0xff]
      %v1158 = vld [vmem:[%s9 + $0x40] sm:$0xff]
      %v1159 = vld [vmem:[%s9 + $0x48] sm:$0xff]
      %v1160 = vld [vmem:[%s9 + $0x50] sm:$0xff]
      %v1161 = vld [vmem:[%s9 + $0x58] sm:$0xff]
      %v1162 = vld [vmem:[%s9 + $0x60] sm:$0xff]
      %v1163 = vld [vmem:[%s9 + $0x68] sm:$0xff]
      %v1164 = vld [vmem:[%s9 + $0x70] sm:$0xff]
      %v1165 = vld [vmem:[%s9 + $0x78] sm:$0xff]
      %v1166 = vld [vmem:[%s9 + $0x80] sm:$0xff]
      %v1167 = vld [vmem:[%s9 + $0x88] sm:$0xff]
      %v1168 = vld [vmem:[%s9 + $0x90] sm:$0xff]
      %v1169 = vld [vmem:[%s9 + $0x98] sm:$0xff]
      %v1170 = vld [vmem:[%s9 + $0xa0] sm:$0xff]
      %v1171 = vld [vmem:[%s9 + $0xa8] sm:$0xff]
      %v1172 = vld [vmem:[%s9 + $0xb0] sm:$0xff]
      %v1173 = vld [vmem:[%s9 + $0xb8] sm:$0xff]
      %v1174 = vld [vmem:[%s9 + $0xc0] sm:$0xff]
      %v1175 = vld [vmem:[%s9 + $0xc8] sm:$0xff]
      %v1176 = vld [vmem:[%s9 + $0xd0] sm:$0xff]
      %v1177 = vld [vmem:[%s9 + $0xd8] sm:$0xff]
      %v1178 = vld [vmem:[%s9 + $0xe0] sm:$0xff]
      %v1179 = vld [vmem:[%s9 + $0xe8] sm:$0xff]
      %v1180 = vld [vmem:[%s9 + $0xf0] sm:$0xff]
      %v1181 = vld [vmem:[%s9 + $0xf8] sm:$0xff]
      %v1182 = vld [vmem:[%s10] sm:$0xf]
      %v1184 = vlaneseq
      %v1185 = vshrl.u32 %v1184, 7
      %v1186 = vsub.s32 0, %v1185
      %v1187 = vrot.slane %v1182, %v1186
      %v1188 = vlaneseq
      %v1189 = vshrl.u32 %v1188, 7
      %v1190 = vsub.s32 1, %v1189
      %v1191 = vrot.slane %v1182, %v1190
      %v1192 = vlaneseq
      %v1193 = vshrl.u32 %v1192, 7
      %v1194 = vsub.s32 2, %v1193
      %v1195 = vrot.slane %v1182, %v1194
      %v1196 = vlaneseq
      %v1197 = vshrl.u32 %v1196, 7
      %v1198 = vsub.s32 3, %v1197
      %v1199 = vrot.slane %v1182, %v1198
      %v1236 = vunpack.c.l.b16 %v1150
      %v1237 = vunpack.c.h.b16 %v1150
      %v1238 = vunpack.c.l.b16 %v1151
      %v1239 = vunpack.c.h.b16 %v1151
      %v1240 = vunpack.c.l.b16 %v1152
      %v1241 = vunpack.c.h.b16 %v1152
      %v1242 = vunpack.c.l.b16 %v1153
      %v1243 = vunpack.c.h.b16 %v1153
      %v1244 = vunpack.c.l.b16 %v1154
      %v1245 = vunpack.c.h.b16 %v1154
      %v1246 = vunpack.c.l.b16 %v1155
      %v1247 = vunpack.c.h.b16 %v1155
      %v1248 = vunpack.c.l.b16 %v1156
      %v1249 = vunpack.c.h.b16 %v1156
      %v1250 = vunpack.c.l.b16 %v1157
      %v1251 = vunpack.c.h.b16 %v1157
      %v1252 = vunpack.c.l.b16 %v1158
      %v1253 = vunpack.c.h.b16 %v1158
      %v1254 = vunpack.c.l.b16 %v1159
      %v1255 = vunpack.c.h.b16 %v1159
      %v1256 = vunpack.c.l.b16 %v1160
      %v1257 = vunpack.c.h.b16 %v1160
      %v1258 = vunpack.c.l.b16 %v1161
      %v1259 = vunpack.c.h.b16 %v1161
      %v1260 = vunpack.c.l.b16 %v1162
      %v1261 = vunpack.c.h.b16 %v1162
      %v1262 = vunpack.c.l.b16 %v1163
      %v1263 = vunpack.c.h.b16 %v1163
      %v1264 = vunpack.c.l.b16 %v1164
      %v1265 = vunpack.c.h.b16 %v1164
      %v1266 = vunpack.c.l.b16 %v1165
      %v1267 = vunpack.c.h.b16 %v1165
      %v1268 = vunpack.c.l.b16 %v1166
      %v1269 = vunpack.c.h.b16 %v1166
      %v1270 = vunpack.c.l.b16 %v1167
      %v1271 = vunpack.c.h.b16 %v1167
      %v1272 = vunpack.c.l.b16 %v1168
      %v1273 = vunpack.c.h.b16 %v1168
      %v1274 = vunpack.c.l.b16 %v1169
      %v1275 = vunpack.c.h.b16 %v1169
      %v1276 = vunpack.c.l.b16 %v1170
      %v1277 = vunpack.c.h.b16 %v1170
      %v1278 = vunpack.c.l.b16 %v1171
      %v1279 = vunpack.c.h.b16 %v1171
      %v1280 = vunpack.c.l.b16 %v1172
      %v1281 = vunpack.c.h.b16 %v1172
      %v1282 = vunpack.c.l.b16 %v1173
      %v1283 = vunpack.c.h.b16 %v1173
      %v1284 = vunpack.c.l.b16 %v1174
      %v1285 = vunpack.c.h.b16 %v1174
      %v1286 = vunpack.c.l.b16 %v1175
      %v1287 = vunpack.c.h.b16 %v1175
      %v1288 = vunpack.c.l.b16 %v1176
      %v1289 = vunpack.c.h.b16 %v1176
      %v1290 = vunpack.c.l.b16 %v1177
      %v1291 = vunpack.c.h.b16 %v1177
      %v1292 = vunpack.c.l.b16 %v1178
      %v1293 = vunpack.c.h.b16 %v1178
      %v1294 = vunpack.c.l.b16 %v1179
      %v1295 = vunpack.c.h.b16 %v1179
      %v1296 = vunpack.c.l.b16 %v1180
      %v1297 = vunpack.c.h.b16 %v1180
      %v1298 = vunpack.c.l.b16 %v1181
      %v1299 = vunpack.c.h.b16 %v1181
      %v1300 = vpack.c.b16 %v1240, %v1236
      %v1301 = vpack.c.b16 %v1241, %v1237
      %v1302 = vpack.c.b16 %v1242, %v1238
      %v1303 = vpack.c.b16 %v1243, %v1239
      %v1304 = vpack.c.b16 %v1248, %v1244
      %v1305 = vpack.c.b16 %v1249, %v1245
      %v1306 = vpack.c.b16 %v1250, %v1246
      %v1307 = vpack.c.b16 %v1251, %v1247
      %v1308 = vpack.c.b16 %v1256, %v1252
      %v1309 = vpack.c.b16 %v1257, %v1253
      %v1310 = vpack.c.b16 %v1258, %v1254
      %v1311 = vpack.c.b16 %v1259, %v1255
      %v1312 = vpack.c.b16 %v1264, %v1260
      %v1313 = vpack.c.b16 %v1265, %v1261
      %v1314 = vpack.c.b16 %v1266, %v1262
      %v1315 = vpack.c.b16 %v1267, %v1263
      %v1316 = vpack.c.b16 %v1272, %v1268
      %v1317 = vpack.c.b16 %v1273, %v1269
      %v1318 = vpack.c.b16 %v1274, %v1270
      %v1319 = vpack.c.b16 %v1275, %v1271
      %v1320 = vpack.c.b16 %v1280, %v1276
      %v1321 = vpack.c.b16 %v1281, %v1277
      %v1322 = vpack.c.b16 %v1282, %v1278
      %v1323 = vpack.c.b16 %v1283, %v1279
      %v1324 = vpack.c.b16 %v1288, %v1284
      %v1325 = vpack.c.b16 %v1289, %v1285
      %v1326 = vpack.c.b16 %v1290, %v1286
      %v1327 = vpack.c.b16 %v1291, %v1287
      %v1328 = vpack.c.b16 %v1296, %v1292
      %v1329 = vpack.c.b16 %v1297, %v1293
      %v1330 = vpack.c.b16 %v1298, %v1294
      %v1331 = vpack.c.b16 %v1299, %v1295
      %1364 = vmatprep.subr.bf16.mxu0 %v1301
      %1365 = vmatpush1.bf16.msra.mxu0 %v1300
      %1366 = vmatprep.subr.bf16.mxu0 %v1305
      %1367 = vmatpush1.bf16.msra.mxu0 %v1304
      %1368 = vmatprep.subr.bf16.mxu0 %v1309
      %1369 = vmatpush1.bf16.msra.mxu0 %v1308
      %1370 = vmatprep.subr.bf16.mxu0 %v1313
      %1371 = vmatpush1.bf16.msra.mxu0 %v1312
      %1372 = vmatprep.subr.bf16.mxu0 %v1317
      %1373 = vmatpush1.bf16.msra.mxu0 %v1316
      %1374 = vmatprep.subr.bf16.mxu0 %v1321
      %1375 = vmatpush1.bf16.msra.mxu0 %v1320
      %1376 = vmatprep.subr.bf16.mxu0 %v1325
      %1377 = vmatpush1.bf16.msra.mxu0 %v1324
      %1378 = vmatprep.subr.bf16.mxu0 %v1329
      %1379 = vmatpush1.bf16.msra.mxu0 %v1328
      %1380 = vmatprep.subr.bf16.mxu0 0
      %1381 = vmatpush1.bf16.msra.mxu0 0
      %1382 = vmatprep.subr.bf16.mxu0 0
      %1383 = vmatpush1.bf16.msra.mxu0 0
      %1384 = vmatprep.subr.bf16.mxu0 0
      %1385 = vmatpush1.bf16.msra.mxu0 0
      %1386 = vmatprep.subr.bf16.mxu0 0
      %1387 = vmatpush1.bf16.msra.mxu0 0
      %1388 = vmatprep.subr.bf16.mxu0 0
      %1389 = vmatpush1.bf16.msra.mxu0 0
      %1390 = vmatprep.subr.bf16.mxu0 0
      %1391 = vmatpush1.bf16.msra.mxu0 0
      %1392 = vmatprep.subr.bf16.mxu0 0
      %1393 = vmatpush1.bf16.msra.mxu0 0
      %1394 = vmatprep.subr.bf16.mxu0 0
      %1395 = vmatpush1.bf16.msra.mxu0 0
      %1396 = vmatprep.mubr.bf16.mxu0 0
      %1397 = vmatmul.mubr.bf16.gmra.mrb[0].mxu0 %v1149
      %v1398 = vpop.f32.mrb[0].mxu0
      %v1399 = vadd.f32 %v1187, %v1398
      %v1400 = vpop.f32.mrb[0].mxu0
      %v1401 = vadd.f32 %v1191, %v1400
      %v1402 = vpop.f32.mrb[0].mxu0
      %v1403 = vadd.f32 %v1187, %v1402
      %v1404 = vpop.f32.mrb[0].mxu0
      %v1405 = vadd.f32 %v1191, %v1404
      %1406 = vdwg.mxu0
      %1407 = vmatprep.subr.bf16.mxu0 %v1303
      %1408 = vmatpush1.bf16.msra.mxu0 %v1302
      %1409 = vmatprep.subr.bf16.mxu0 %v1307
      %1410 = vmatpush1.bf16.msra.mxu0 %v1306
      %1411 = vmatprep.subr.bf16.mxu0 %v1311
      %1412 = vmatpush1.bf16.msra.mxu0 %v1310
      %1413 = vmatprep.subr.bf16.mxu0 %v1315
      %1414 = vmatpush1.bf16.msra.mxu0 %v1314
      %1415 = vmatprep.subr.bf16.mxu0 %v1319
      %1416 = vmatpush1.bf16.msra.mxu0 %v1318
      %1417 = vmatprep.subr.bf16.mxu0 %v1323
      %1418 = vmatpush1.bf16.msra.mxu0 %v1322
      %1419 = vmatprep.subr.bf16.mxu0 %v1327
      %1420 = vmatpush1.bf16.msra.mxu0 %v1326
      %1421 = vmatprep.subr.bf16.mxu0 %v1331
      %1422 = vmatpush1.bf16.msra.mxu0 %v1330
      %1423 = vmatprep.subr.bf16.mxu0 0
      %1424 = vmatpush1.bf16.msra.mxu0 0
      %1425 = vmatprep.subr.bf16.mxu0 0
      %1426 = vmatpush1.bf16.msra.mxu0 0
      %1427 = vmatprep.subr.bf16.mxu0 0
      %1428 = vmatpush1.bf16.msra.mxu0 0
      %1429 = vmatprep.subr.bf16.mxu0 0
      %1430 = vmatpush1.bf16.msra.mxu0 0
      %1431 = vmatprep.subr.bf16.mxu0 0
      %1432 = vmatpush1.bf16.msra.mxu0 0
      %1433 = vmatprep.subr.bf16.mxu0 0
      %1434 = vmatpush1.bf16.msra.mxu0 0
      %1435 = vmatprep.subr.bf16.mxu0 0
      %1436 = vmatpush1.bf16.msra.mxu0 0
      %1437 = vmatprep.subr.bf16.mxu0 0
      %1438 = vmatpush1.bf16.msra.mxu0 0
      %1439 = vmatprep.mubr.bf16.mxu0 0
      %1440 = vmatmul.mubr.bf16.gmra.mrb[0].mxu0 %v1149
      %v1441 = vpop.f32.mrb[0].mxu0
      %v1442 = vadd.f32 %v1195, %v1441
      %v1443 = vpop.f32.mrb[0].mxu0
      %v1444 = vadd.f32 %v1199, %v1443
      %v1445 = vpop.f32.mrb[0].mxu0
      %v1446 = vadd.f32 %v1195, %v1445
      %v1447 = vpop.f32.mrb[0].mxu0
      %v1448 = vadd.f32 %v1199, %v1447
      %1449 = vdwg.mxu0
      %v1450 = vmax.f32 %v1399, 0.0
      %v1451 = vmax.f32 %v1401, 0.0
      %v1452 = vmax.f32 %v1442, 0.0
      %v1453 = vmax.f32 %v1444, 0.0
      %v1454 = vmax.f32 %v1403, 0.0
      %v1455 = vmax.f32 %v1405, 0.0
      %v1456 = vmax.f32 %v1446, 0.0
      %v1457 = vmax.f32 %v1448, 0.0
      %v1458 = vpack.c.bf16 %v1454, %v1450
      %v1459 = vpack.c.bf16 %v1455, %v1451
      %v1460 = vpack.c.bf16 %v1456, %v1452
      %v1461 = vpack.c.bf16 %v1457, %v1453
      %v1462 = vld [vmem:[%s11] sm:$0xf]
      %v1463 = vld [vmem:[%s11 + $0x4] sm:$0xf]
      %v1464 = vld [vmem:[%s11 + $0x8] sm:$0xf]
      %v1465 = vld [vmem:[%s11 + $0xc] sm:$0xf]
      %v1466 = vld [vmem:[%s11 + $0x10] sm:$0xf]
      %v1467 = vld [vmem:[%s11 + $0x14] sm:$0xf]
      %v1468 = vld [vmem:[%s11 + $0x18] sm:$0xf]
      %v1469 = vld [vmem:[%s11 + $0x1c] sm:$0xf]
      %v1470 = vld [vmem:[%s11 + $0x20] sm:$0xf]
      %v1471 = vld [vmem:[%s11 + $0x24] sm:$0xf]
      %v1472 = vld [vmem:[%s11 + $0x28] sm:$0xf]
      %v1473 = vld [vmem:[%s11 + $0x2c] sm:$0xf]
      %v1474 = vld [vmem:[%s11 + $0x30] sm:$0xf]
      %v1475 = vld [vmem:[%s11 + $0x34] sm:$0xf]
      %v1476 = vld [vmem:[%s11 + $0x38] sm:$0xf]
      %v1477 = vld [vmem:[%s11 + $0x3c] sm:$0xf]
      %v1478 = vld [vmem:[%s11 + $0x40] sm:$0xf]
      %v1479 = vld [vmem:[%s11 + $0x44] sm:$0xf]
      %v1480 = vld [vmem:[%s11 + $0x48] sm:$0xf]
      %v1481 = vld [vmem:[%s11 + $0x4c] sm:$0xf]
      %v1482 = vld [vmem:[%s11 + $0x50] sm:$0xf]
      %v1483 = vld [vmem:[%s11 + $0x54] sm:$0xf]
      %v1484 = vld [vmem:[%s11 + $0x58] sm:$0xf]
      %v1485 = vld [vmem:[%s11 + $0x5c] sm:$0xf]
      %v1486 = vld [vmem:[%s11 + $0x60] sm:$0xf]
      %v1487 = vld [vmem:[%s11 + $0x64] sm:$0xf]
      %v1488 = vld [vmem:[%s11 + $0x68] sm:$0xf]
      %v1489 = vld [vmem:[%s11 + $0x6c] sm:$0xf]
      %v1490 = vld [vmem:[%s11 + $0x70] sm:$0xf]
      %v1491 = vld [vmem:[%s11 + $0x74] sm:$0xf]
      %v1492 = vld [vmem:[%s11 + $0x78] sm:$0xf]
      %v1493 = vld [vmem:[%s11 + $0x7c] sm:$0xf]
      %v1494 = vld [vmem:[%s11 + $0x80] sm:$0xf]
      %v1495 = vld [vmem:[%s11 + $0x84] sm:$0xf]
      %v1496 = vld [vmem:[%s11 + $0x88] sm:$0xf]
      %v1497 = vld [vmem:[%s11 + $0x8c] sm:$0xf]
      %v1498 = vld [vmem:[%s11 + $0x90] sm:$0xf]
      %v1499 = vld [vmem:[%s11 + $0x94] sm:$0xf]
      %v1500 = vld [vmem:[%s11 + $0x98] sm:$0xf]
      %v1501 = vld [vmem:[%s11 + $0x9c] sm:$0xf]
      %v1502 = vld [vmem:[%s11 + $0xa0] sm:$0xf]
      %v1503 = vld [vmem:[%s11 + $0xa4] sm:$0xf]
      %v1504 = vld [vmem:[%s11 + $0xa8] sm:$0xf]
      %v1505 = vld [vmem:[%s11 + $0xac] sm:$0xf]
      %v1506 = vld [vmem:[%s11 + $0xb0] sm:$0xf]
      %v1507 = vld [vmem:[%s11 + $0xb4] sm:$0xf]
      %v1508 = vld [vmem:[%s11 + $0xb8] sm:$0xf]
      %v1509 = vld [vmem:[%s11 + $0xbc] sm:$0xf]
      %v1510 = vld [vmem:[%s11 + $0xc0] sm:$0xf]
      %v1511 = vld [vmem:[%s11 + $0xc4] sm:$0xf]
      %v1512 = vld [vmem:[%s11 + $0xc8] sm:$0xf]
      %v1513 = vld [vmem:[%s11 + $0xcc] sm:$0xf]
      %v1514 = vld [vmem:[%s11 + $0xd0] sm:$0xf]
      %v1515 = vld [vmem:[%s11 + $0xd4] sm:$0xf]
      %v1516 = vld [vmem:[%s11 + $0xd8] sm:$0xf]
      %v1517 = vld [vmem:[%s11 + $0xdc] sm:$0xf]
      %v1518 = vld [vmem:[%s11 + $0xe0] sm:$0xf]
      %v1519 = vld [vmem:[%s11 + $0xe4] sm:$0xf]
      %v1520 = vld [vmem:[%s11 + $0xe8] sm:$0xf]
      %v1521 = vld [vmem:[%s11 + $0xec] sm:$0xf]
      %v1522 = vld [vmem:[%s11 + $0xf0] sm:$0xf]
      %v1523 = vld [vmem:[%s11 + $0xf4] sm:$0xf]
      %v1524 = vld [vmem:[%s11 + $0xf8] sm:$0xf]
      %v1525 = vld [vmem:[%s11 + $0xfc] sm:$0xf]
      %v1526 = vld [vmem:[%s12] sm:$0x1]
      %v1528 = vlaneseq
      %v1529 = vshrl.u32 %v1528, 7
      %v1530 = vsub.s32 0, %v1529
      %v1531 = vrot.slane %v1526, %v1530
      %v1597 = vunpack.c.l.b16 %v1462
      %v1598 = vunpack.c.l.b16 %v1463
      %v1599 = vunpack.c.l.b16 %v1464
      %v1600 = vunpack.c.l.b16 %v1465
      %v1601 = vunpack.c.l.b16 %v1466
      %v1602 = vunpack.c.l.b16 %v1467
      %v1603 = vunpack.c.l.b16 %v1468
      %v1604 = vunpack.c.l.b16 %v1469
      %v1605 = vunpack.c.l.b16 %v1470
      %v1606 = vunpack.c.l.b16 %v1471
      %v1607 = vunpack.c.l.b16 %v1472
      %v1608 = vunpack.c.l.b16 %v1473
      %v1609 = vunpack.c.l.b16 %v1474
      %v1610 = vunpack.c.l.b16 %v1475
      %v1611 = vunpack.c.l.b16 %v1476
      %v1612 = vunpack.c.l.b16 %v1477
      %v1613 = vunpack.c.l.b16 %v1478
      %v1614 = vunpack.c.l.b16 %v1479
      %v1615 = vunpack.c.l.b16 %v1480
      %v1616 = vunpack.c.l.b16 %v1481
      %v1617 = vunpack.c.l.b16 %v1482
      %v1618 = vunpack.c.l.b16 %v1483
      %v1619 = vunpack.c.l.b16 %v1484
      %v1620 = vunpack.c.l.b16 %v1485
      %v1621 = vunpack.c.l.b16 %v1486
      %v1622 = vunpack.c.l.b16 %v1487
      %v1623 = vunpack.c.l.b16 %v1488
      %v1624 = vunpack.c.l.b16 %v1489
      %v1625 = vunpack.c.l.b16 %v1490
      %v1626 = vunpack.c.l.b16 %v1491
      %v1627 = vunpack.c.l.b16 %v1492
      %v1628 = vunpack.c.l.b16 %v1493
      %v1629 = vunpack.c.l.b16 %v1494
      %v1630 = vunpack.c.l.b16 %v1495
      %v1631 = vunpack.c.l.b16 %v1496
      %v1632 = vunpack.c.l.b16 %v1497
      %v1633 = vunpack.c.l.b16 %v1498
      %v1634 = vunpack.c.l.b16 %v1499
      %v1635 = vunpack.c.l.b16 %v1500
      %v1636 = vunpack.c.l.b16 %v1501
      %v1637 = vunpack.c.l.b16 %v1502
      %v1638 = vunpack.c.l.b16 %v1503
      %v1639 = vunpack.c.l.b16 %v1504
      %v1640 = vunpack.c.l.b16 %v1505
      %v1641 = vunpack.c.l.b16 %v1506
      %v1642 = vunpack.c.l.b16 %v1507
      %v1643 = vunpack.c.l.b16 %v1508
      %v1644 = vunpack.c.l.b16 %v1509
      %v1645 = vunpack.c.l.b16 %v1510
      %v1646 = vunpack.c.l.b16 %v1511
      %v1647 = vunpack.c.l.b16 %v1512
      %v1648 = vunpack.c.l.b16 %v1513
      %v1649 = vunpack.c.l.b16 %v1514
      %v1650 = vunpack.c.l.b16 %v1515
      %v1651 = vunpack.c.l.b16 %v1516
      %v1652 = vunpack.c.l.b16 %v1517
      %v1653 = vunpack.c.l.b16 %v1518
      %v1654 = vunpack.c.l.b16 %v1519
      %v1655 = vunpack.c.l.b16 %v1520
      %v1656 = vunpack.c.l.b16 %v1521
      %v1657 = vunpack.c.l.b16 %v1522
      %v1658 = vunpack.c.l.b16 %v1523
      %v1659 = vunpack.c.l.b16 %v1524
      %v1660 = vunpack.c.l.b16 %v1525
      %v1661 = vpack.c.b16 %v1598, %v1597
      %v1662 = vpack.c.b16 %v1600, %v1599
      %v1663 = vpack.c.b16 %v1602, %v1601
      %v1664 = vpack.c.b16 %v1604, %v1603
      %v1665 = vpack.c.b16 %v1606, %v1605
      %v1666 = vpack.c.b16 %v1608, %v1607
      %v1667 = vpack.c.b16 %v1610, %v1609
      %v1668 = vpack.c.b16 %v1612, %v1611
      %v1669 = vpack.c.b16 %v1614, %v1613
      %v1670 = vpack.c.b16 %v1616, %v1615
      %v1671 = vpack.c.b16 %v1618, %v1617
      %v1672 = vpack.c.b16 %v1620, %v1619
      %v1673 = vpack.c.b16 %v1622, %v1621
      %v1674 = vpack.c.b16 %v1624, %v1623
      %v1675 = vpack.c.b16 %v1626, %v1625
      %v1676 = vpack.c.b16 %v1628, %v1627
      %v1677 = vpack.c.b16 %v1630, %v1629
      %v1678 = vpack.c.b16 %v1632, %v1631
      %v1679 = vpack.c.b16 %v1634, %v1633
      %v1680 = vpack.c.b16 %v1636, %v1635
      %v1681 = vpack.c.b16 %v1638, %v1637
      %v1682 = vpack.c.b16 %v1640, %v1639
      %v1683 = vpack.c.b16 %v1642, %v1641
      %v1684 = vpack.c.b16 %v1644, %v1643
      %v1685 = vpack.c.b16 %v1646, %v1645
      %v1686 = vpack.c.b16 %v1648, %v1647
      %v1687 = vpack.c.b16 %v1650, %v1649
      %v1688 = vpack.c.b16 %v1652, %v1651
      %v1689 = vpack.c.b16 %v1654, %v1653
      %v1690 = vpack.c.b16 %v1656, %v1655
      %v1691 = vpack.c.b16 %v1658, %v1657
      %v1692 = vpack.c.b16 %v1660, %v1659
      %1725 = vmatprep.subr.bf16.mxu0 0
      %1726 = vmatpush1.bf16.msra.mxu0 %v1661
      %1727 = vmatprep.subr.bf16.mxu0 0
      %1728 = vmatpush1.bf16.msra.mxu0 %v1662
      %1729 = vmatprep.subr.bf16.mxu0 0
      %1730 = vmatpush1.bf16.msra.mxu0 %v1663
      %1731 = vmatprep.subr.bf16.mxu0 0
      %1732 = vmatpush1.bf16.msra.mxu0 %v1664
      %1733 = vmatprep.subr.bf16.mxu0 0
      %1734 = vmatpush1.bf16.msra.mxu0 %v1665
      %1735 = vmatprep.subr.bf16.mxu0 0
      %1736 = vmatpush1.bf16.msra.mxu0 %v1666
      %1737 = vmatprep.subr.bf16.mxu0 0
      %1738 = vmatpush1.bf16.msra.mxu0 %v1667
      %1739 = vmatprep.subr.bf16.mxu0 0
      %1740 = vmatpush1.bf16.msra.mxu0 %v1668
      %1741 = vmatprep.subr.bf16.mxu0 0
      %1742 = vmatpush1.bf16.msra.mxu0 %v1669
      %1743 = vmatprep.subr.bf16.mxu0 0
      %1744 = vmatpush1.bf16.msra.mxu0 %v1670
      %1745 = vmatprep.subr.bf16.mxu0 0
      %1746 = vmatpush1.bf16.msra.mxu0 %v1671
      %1747 = vmatprep.subr.bf16.mxu0 0
      %1748 = vmatpush1.bf16.msra.mxu0 %v1672
      %1749 = vmatprep.subr.bf16.mxu0 0
      %1750 = vmatpush1.bf16.msra.mxu0 %v1673
      %1751 = vmatprep.subr.bf16.mxu0 0
      %1752 = vmatpush1.bf16.msra.mxu0 %v1674
      %1753 = vmatprep.subr.bf16.mxu0 0
      %1754 = vmatpush1.bf16.msra.mxu0 %v1675
      %1755 = vmatprep.subr.bf16.mxu0 0
      %1756 = vmatpush1.bf16.msra.mxu0 %v1676
      %1757 = vmatprep.mubr.bf16.mxu0 %v1459
      %1758 = vmatmul.mubr.bf16.gmra.mrb[0].mxu0 %v1458
      %v1759 = vpop.f32.mrb[0].mxu0
      %v1760 = vadd.f32 %v1531, %v1759
      %v1761 = vpop.f32.mrb[0].mxu0
      %v1762 = vpop.f32.mrb[0].mxu0
      %v1763 = vadd.f32 %v1531, %v1762
      %v1764 = vpop.f32.mrb[0].mxu0
      %1765 = vdwg.mxu0
      %1766 = vmatprep.subr.bf16.mxu0 0
      %1767 = vmatpush1.bf16.msra.mxu0 %v1677
      %1768 = vmatprep.subr.bf16.mxu0 0
      %1769 = vmatpush1.bf16.msra.mxu0 %v1678
      %1770 = vmatprep.subr.bf16.mxu0 0
      %1771 = vmatpush1.bf16.msra.mxu0 %v1679
      %1772 = vmatprep.subr.bf16.mxu0 0
      %1773 = vmatpush1.bf16.msra.mxu0 %v1680
      %1774 = vmatprep.subr.bf16.mxu0 0
      %1775 = vmatpush1.bf16.msra.mxu0 %v1681
      %1776 = vmatprep.subr.bf16.mxu0 0
      %1777 = vmatpush1.bf16.msra.mxu0 %v1682
      %1778 = vmatprep.subr.bf16.mxu0 0
      %1779 = vmatpush1.bf16.msra.mxu0 %v1683
      %1780 = vmatprep.subr.bf16.mxu0 0
      %1781 = vmatpush1.bf16.msra.mxu0 %v1684
      %1782 = vmatprep.subr.bf16.mxu0 0
      %1783 = vmatpush1.bf16.msra.mxu0 %v1685
      %1784 = vmatprep.subr.bf16.mxu0 0
      %1785 = vmatpush1.bf16.msra.mxu0 %v1686
      %1786 = vmatprep.subr.bf16.mxu0 0
      %1787 = vmatpush1.bf16.msra.mxu0 %v1687
      %1788 = vmatprep.subr.bf16.mxu0 0
      %1789 = vmatpush1.bf16.msra.mxu0 %v1688
      %1790 = vmatprep.subr.bf16.mxu0 0
      %1791 = vmatpush1.bf16.msra.mxu0 %v1689
      %1792 = vmatprep.subr.bf16.mxu0 0
      %1793 = vmatpush1.bf16.msra.mxu0 %v1690
      %1794 = vmatprep.subr.bf16.mxu0 0
      %1795 = vmatpush1.bf16.msra.mxu0 %v1691
      %1796 = vmatprep.subr.bf16.mxu0 0
      %1797 = vmatpush1.bf16.msra.mxu0 %v1692
      %1798 = vmatprep.mubr.bf16.mxu0 %v1461
      %1799 = vmatmul.mubr.bf16.gmra.mrb[0].mxu0 %v1460
      %v1800 = vpop.f32.mrb[0].mxu0
      %v1801 = vadd.f32 %v1760, %v1800
      %v1802 = vpop.f32.mrb[0].mxu0
      %v1803 = vpop.f32.mrb[0].mxu0
      %v1804 = vadd.f32 %v1763, %v1803
      %v1805 = vpop.f32.mrb[0].mxu0
      %1806 = vdwg.mxu0
      %v1807 = vadd.f32 %v1107, %v1801
      %v1808 = vadd.f32 %v1108, %v1804
      %1809 = vst [vmem:[%s440] sm:$0xff] %v1807
      %1810 = vst [vmem:[%s440 + $0x8] sm:$0xff] %v1808
      %p1811 = scmp.lt.s32.totalorder %s24, 1
      %s1812 = scalar_select %p1811, %s24, 1
      %s1813 = smul.addr %s1812, 2
      %s1814 = smul.addr %s1813, 8
      %s1815 = scalar_lea.vmem %s13, %s1814
      // Predicated region
      $region73: #{transformer_forward.3} parent=71 // pred_check
        %p1816 = pneg %p320
      $region74: #{transformer_forward.3} parent=71 // pred_check_branch
        %1818 = sbr.rel (%p1816) target = $region76
      $region75: #{transformer_forward.3} parent=71 // pred_region
        _
      $region76: #{transformer_forward.3} parent=71 // pred_fallthru
        _
    $region72: #{transformer_forward.3} parent=5 // pred_fallthru
      _
    %p1819 = scmp.le.s32.totalorder 2, %s19
    // Predicated region
    $region77: #{transformer_forward.3} parent=5 // pred_check
      %p1820 = pneg %p1819
    $region78: #{transformer_forward.3} parent=5 // pred_check_branch
      %1822 = sbr.rel (%p1820) target = $region80
    $region79: #{transformer_forward.3} parent=5 // pred_region
      %s1823 = ssub.s32 %s19, 2
      // Predicated region
      $region81: #{transformer_forward.3} parent=79 // pred_check
        %p1824 = pneg %p326
      $region82: #{transformer_forward.3} parent=79 // pred_check_branch
        %1826 = sbr.rel (%p1824) target = $region84
      $region83: #{transformer_forward.3} parent=79 // pred_region
        %p1827 = scmp.lt.s32.totalorder %s25, 1
        %s1828 = scalar_select %p1827, %s25, 1
        %s1829 = smul.addr %s1828, 2
        %s1830 = smul.addr %s1829, 8
        %s1831 = scalar_lea.vmem %s13, %s1830
      $region84: #{transformer_forward.3} parent=79 // pred_fallthru
        _
    $region80: #{transformer_forward.3} parent=5 // pred_fallthru
      _
  $region6: #{transformer_forward.3} parent=0 // loop_footer
    %s23 = sadd.s32 1, %s19
  $region7: #{transformer_forward.3} parent=0 // loop_footer_branch
    %18 = sbr.rel target = $region3
  $region8: #{transformer_forward.3} parent=0 // loop_exit
    _

</llo_original>
